<compile_context>
chip_gen: v7x
topology: tpu7x:2x2x1
jax: 0.10.0
libtpu: 0.0.40
codegen_flags: <defaults>
</compile_context>

<pallas_src>
import functools

import jax
import jax.numpy as jnp
from jax import lax
from jax.experimental import pallas as pl
from jax.experimental.pallas import tpu as pltpu

HIDDEN = 32
VOCAB_SIZE = 50
GATE_PITCH = 128          # lane pitch per gate group (vreg-aligned slices)


def _sigmoid_kernel(x):
    # EUP exp + EUP approx reciprocal (keeps the VALU off the recurrence critical path).
    return pl.reciprocal(1.0 + jnp.exp(-x), approx=True)


def _sigmoid_ref(x):
    return 1.0 / (1.0 + jnp.exp(-x))


# ----------------------------------------------------------------------------
# fused kernel: one-hot embedding + bidirectional GRU (time-major outputs + final hidden)
# ----------------------------------------------------------------------------
def _text_encoder_kernel(ids_ref, emb2_ref, w2_ref, b2_ref, wh_ref, bhn_ref,
                         out_ref, hid_ref):
    TB = ids_ref.shape[0]              # T * B (time-major flattened tokens)
    V2 = emb2_ref.shape[0]
    V = V2 // 2
    T, B, H2 = out_ref.shape           # time-major output, H2 = 2 * H
    H = H2 // 2
    GP = GATE_PITCH

    # One (TB, 2V) one-hot carrying BOTH streams: forward id in cols [0, V),
    # reversed-time id (+V) in cols [V, 2V).  emb2 is blockdiag(embed, embed), so the
    # single MXU matmul yields x2 = [embed[id_fwd] | embed[id_rev]]  (padding row 0 = 0).
    ids = ids_ref[...]                                             # (TB, 2) int32
    iota = lax.broadcasted_iota(jnp.int32, (TB, V2), 1)
    tgt = jnp.where(iota < V, ids[:, 0:1], ids[:, 1:2] + V)
    oh = jnp.where(iota == tgt, 1.0, 0.0)
    x2 = jnp.dot(oh, emb2_ref[...], preferred_element_type=jnp.float32)     # (TB, 2H)

    # Single hoisted input projection for all timesteps / both directions.
    # Column groups (128-lane pitch): [r_f r_b | z_f z_b | n_f n_b]; b_ih (+ b_hh for
    # r, z) pre-folded into b2; b_hn stays in the loop since it sits inside r * (...).
    gi = jnp.dot(x2, w2_ref[...], preferred_element_type=jnp.float32) + b2_ref[...]
    gi_r = gi[:, 0:H2]                                             # (TB, 2H) fwd||bwd
    gi_z = gi[:, GP:GP + H2]
    gi_n = gi[:, 2 * GP:2 * GP + H2]

    wh = wh_ref[...]                                               # (2H, 3*128) fused
    bhn_b = jnp.broadcast_to(bhn_ref[...], (B, H2))                # hoisted broadcast

    # Row block s*B:(s+1)*B of gi_* pairs forward time s with backward time T-1-s, so the
    # serial recurrence below needs only static aligned sublane slices.
    h = jnp.zeros((B, H2), jnp.float32)                            # [h_fwd | h_bwd]
    for s in range(T):                                             # fully unrolled
        lo = s * B
        gh = jnp.dot(h, wh, preferred_element_type=jnp.float32)    # one MXU push / step
        r = _sigmoid_kernel(gi_r[lo:lo + B] + gh[:, 0:H2])
        z = _sigmoid_kernel(gi_z[lo:lo + B] + gh[:, GP:GP + H2])
        n = jnp.tanh(gi_n[lo:lo + B] + r * (gh[:, 2 * GP:2 * GP + H2] + bhn_b))
        h = (1.0 - z) * n + z * h
        out_ref[s] = h                                             # dense (B, 2H) store

    hid_ref[0] = h[:, 0:H]                                         # forward final state
    hid_ref[1] = h[:, H:H2]                                        # backward final state


# ----------------------------------------------------------------------------
# wrapper (single grid-less pallas_call; tiny index/layout reshuffles stay in XLA)
# ----------------------------------------------------------------------------
def text_encoder_forward(kp, text_inds):
    B, T = text_inds.shape
    H = kp["bhn"].shape[1] // 2
    ids_t = text_inds.astype(jnp.int32).T                          # (T, B) time-major
    ids2 = jnp.stack([ids_t.reshape(-1), ids_t[::-1].reshape(-1)], axis=1)  # (T*B, 2)

    vmem = pl.BlockSpec(memory_space=pltpu.MemorySpace.VMEM)
    out_tb, hidden = pl.pallas_call(
        _text_encoder_kernel,
        out_shape=(jax.ShapeDtypeStruct((T, B, 2 * H), jnp.float32),
                   jax.ShapeDtypeStruct((2, B, H), jnp.float32)),
        in_specs=[vmem] * 6,
        out_specs=(vmem, vmem),
    )(ids2, kp["emb2"], kp["w2"], kp["b2"], kp["wh"], kp["bhn"])

    # Kernel wrote step-order slabs: fwd half is time s, bwd half is time T-1-s.
    outputs = jnp.concatenate([out_tb[:, :, :H], out_tb[::-1, :, H:]], axis=-1)
    outputs = jnp.transpose(outputs, (1, 0, 2))                    # (B, T, 2H)
    return outputs, hidden


# ----------------------------------------------------------------------------
# parameter handling
# ----------------------------------------------------------------------------
def init_params(key, H, vocab):
    """Canonical (PyTorch-equivalent) parameters, stored as (in_features, out_features)."""
    keys = iter(jax.random.split(key, 16))

    def u(shape, fan_in):
        k = 1.0 / (fan_in ** 0.5)
        return jax.random.uniform(next(keys), shape, jnp.float32, -k, k)

    embed = jax.random.normal(next(keys), (vocab, H), jnp.float32)
    embed = embed.at[0].set(0.0)                    # padding_idx=0
    return dict(
        embed=embed,
        wih_f=u((H, 3 * H), H), whh_f=u((H, 3 * H), H),
        bih_f=u((1, 3 * H), H), bhh_f=u((1, 3 * H), H),
        wih_b=u((H, 3 * H), H), whh_b=u((H, 3 * H), H),
        bih_b=u((1, 3 * H), H), bhh_b=u((1, 3 * H), H),
    )


def prepare_params(p):
    """One-time exact re-arrangement into the fused kernel layout."""
    H = p["whh_f"].shape[0]
    V = p["embed"].shape[0]
    GP = GATE_PITCH
    zHH = jnp.zeros((H, H), jnp.float32)
    zVH = jnp.zeros((V, H), jnp.float32)

    def blkdiag(a, b):
        return jnp.block([[a, zHH], [zHH, b]])

    emb2 = jnp.block([[p["embed"], zVH], [zVH, p["embed"]]])       # (2V, 2H)

    w2 = jnp.zeros((2 * H, 3 * GP), jnp.float32)                   # input projection
    b2 = jnp.zeros((1, 3 * GP), jnp.float32)
    wh = jnp.zeros((2 * H, 3 * GP), jnp.float32)                   # fused recurrent
    for g in range(3):                                             # gates r, z, n
        cols = slice(g * H, (g + 1) * H)
        off = g * GP
        w2 = w2.at[0:H, off:off + H].set(p["wih_f"][:, cols])
        w2 = w2.at[H:2 * H, off + H:off + 2 * H].set(p["wih_b"][:, cols])
        wh = wh.at[:, off:off + 2 * H].set(
            blkdiag(p["whh_f"][:, cols], p["whh_b"][:, cols]))
        bf, bb = p["bih_f"][:, cols], p["bih_b"][:, cols]
        if g < 2:                                                  # fold b_hh for r, z
            bf = bf + p["bhh_f"][:, cols]
            bb = bb + p["bhh_b"][:, cols]
        b2 = b2.at[:, off:off + H].set(bf)
        b2 = b2.at[:, off + H:off + 2 * H].set(bb)

    bhn = jnp.concatenate([p["bhh_f"][:, 2 * H:3 * H],
                           p["bhh_b"][:, 2 * H:3 * H]], axis=1)    # (1, 2H)
    return dict(emb2=emb2, w2=w2, b2=b2, wh=wh, bhn=bhn)


# ----------------------------------------------------------------------------
# pure-JAX reference (same math, PyTorch GRU semantics) for a sanity check
# ----------------------------------------------------------------------------
def _gru_cell_ref(x, h, wih, whh, bih, bhh, H):
    gi = x @ wih + bih
    gh = h @ whh + bhh
    r = _sigmoid_ref(gi[:, :H] + gh[:, :H])
    z = _sigmoid_ref(gi[:, H:2 * H] + gh[:, H:2 * H])
    n = jnp.tanh(gi[:, 2 * H:] + r * gh[:, 2 * H:])
    return (1.0 - z) * n + z * h


def forward_ref(p, text_inds):
    emb = p["embed"][text_inds]                      # (B, T, H)
    B, T, H = emb.shape
    xs = jnp.transpose(emb, (1, 0, 2))               # (T, B, H)

    def run(wih, whh, bih, bhh, seq):
        def step(h, xt):
            hn = _gru_cell_ref(xt, h, wih, whh, bih, bhh, H)
            return hn, hn
        h_fin, ys = lax.scan(step, jnp.zeros((B, H), jnp.float32), seq)
        return h_fin, ys

    hf, f = run(p["wih_f"], p["whh_f"], p["bih_f"], p["bhh_f"], xs)
    hb, b = run(p["wih_b"], p["whh_b"], p["bih_b"], p["bhh_b"], xs[::-1])
    outputs = jnp.transpose(jnp.concatenate([f, b[::-1]], axis=-1), (1, 0, 2))
    hidden = jnp.stack([hf, hb], axis=0)
    return outputs, hidden


if __name__ == "__main__":
    B, T = 8, 10        # B=8 fills the vreg sublanes

    params = init_params(jax.random.PRNGKey(42), HIDDEN, VOCAB_SIZE)
    kparams = prepare_params(params)

    text_inds = jax.random.randint(jax.random.PRNGKey(0), (B, T), 0, VOCAB_SIZE,
                                   dtype=jnp.int32)

    fwd = jax.jit(functools.partial(text_encoder_forward, kparams))
    outputs, hidden = fwd(text_inds)
    jax.block_until_ready((outputs, hidden))

    assert outputs.shape == (B, T, 2 * HIDDEN)
    assert hidden.shape == (2, B, HIDDEN)
    assert bool(jnp.all(jnp.isfinite(outputs)))
    assert bool(jnp.all(jnp.isfinite(hidden)))

    ref_out, ref_hid = forward_ref(params, text_inds)
    assert bool(jnp.allclose(outputs, ref_out, atol=1e-2, rtol=1e-2))
    assert bool(jnp.allclose(hidden, ref_hid, atol=1e-2, rtol=1e-2))

    print("KERNEL_OK")
</pallas_src>

<mosaic_0001>
module attributes {stable_mosaic.version = 11 : i64} {
  func.func @_text_encoder_kernel(%arg0: memref<80x2xi32, #tpu.memory_space<vmem>>, %arg1: memref<100x64xf32, #tpu.memory_space<vmem>>, %arg2: memref<64x384xf32, #tpu.memory_space<vmem>>, %arg3: memref<1x384xf32, #tpu.memory_space<vmem>>, %arg4: memref<64x384xf32, #tpu.memory_space<vmem>>, %arg5: memref<1x64xf32, #tpu.memory_space<vmem>>, %arg6: memref<10x8x64xf32, #tpu.memory_space<vmem>>, %arg7: memref<2x8x32xf32, #tpu.memory_space<vmem>>) attributes {dimension_semantics = [], scalar_prefetch = 0 : i64, scratch_operands = 0 : i64, tpu.core_type = #tpu.core_type<tc>} {
    %c0 = arith.constant 0 : index
    %c0_0 = arith.constant 0 : index
    %0 = vector.load %arg0[%c0, %c0_0] : memref<80x2xi32, #tpu.memory_space<vmem>>, vector<80x2xi32>
    %1 = tpu.iota {dimensions = array<i32: 1>} : vector<80x100xi32>
    %c50_i32 = arith.constant 50 : i32
    %2 = vector.broadcast %c50_i32 : i32 to vector<80x100xi32>
    %3 = arith.cmpi slt, %1, %2 : vector<80x100xi32>
    %4 = vector.extract_strided_slice %0 {offsets = [0, 0], sizes = [80, 1], strides = [1, 1]} : vector<80x2xi32> to vector<80x1xi32>
    %5 = vector.extract_strided_slice %0 {offsets = [0, 1], sizes = [80, 1], strides = [1, 1]} : vector<80x2xi32> to vector<80x1xi32>
    %c50_i32_1 = arith.constant 50 : i32
    %6 = vector.broadcast %c50_i32_1 : i32 to vector<80x1xi32>
    %7 = arith.addi %5, %6 : vector<80x1xi32>
    %8 = vector.shape_cast %4 : vector<80x1xi32> to vector<80x1xi32>
    %9 = vector.broadcast %8 : vector<80x1xi32> to vector<80x100xi32>
    %10 = vector.shape_cast %7 : vector<80x1xi32> to vector<80x1xi32>
    %11 = vector.broadcast %10 : vector<80x1xi32> to vector<80x100xi32>
    %12 = arith.select %3, %9, %11 : vector<80x100xi1>, vector<80x100xi32>
    %13 = arith.cmpi eq, %1, %12 : vector<80x100xi32>
    %cst = arith.constant 1.000000e+00 : f32
    %cst_2 = arith.constant 0.000000e+00 : f32
    %14 = vector.broadcast %cst : f32 to vector<80x100xf32>
    %15 = vector.broadcast %cst_2 : f32 to vector<80x100xf32>
    %16 = arith.select %13, %14, %15 : vector<80x100xi1>, vector<80x100xf32>
    %c0_3 = arith.constant 0 : index
    %c0_4 = arith.constant 0 : index
    %17 = vector.load %arg1[%c0_3, %c0_4] : memref<100x64xf32, #tpu.memory_space<vmem>>, vector<100x64xf32>
    %cst_5 = arith.constant dense<0.000000e+00> : vector<80x64xf32>
    %18 = tpu.matmul %16, %17, %cst_5 {dimension_numbers = #tpu.dot_dimension_numbers<[1], [0], [0], [1], [0, 0, 1, 1], [], []>} : vector<80x100xf32>, vector<100x64xf32>, vector<80x64xf32> -> vector<80x64xf32>
    %c0_6 = arith.constant 0 : index
    %c0_7 = arith.constant 0 : index
    %19 = vector.load %arg2[%c0_6, %c0_7] : memref<64x384xf32, #tpu.memory_space<vmem>>, vector<64x384xf32>
    %cst_8 = arith.constant dense<0.000000e+00> : vector<80x384xf32>
    %20 = tpu.matmul %18, %19, %cst_8 {dimension_numbers = #tpu.dot_dimension_numbers<[1], [0], [0], [1], [0, 0, 1, 1], [], []>} : vector<80x64xf32>, vector<64x384xf32>, vector<80x384xf32> -> vector<80x384xf32>
    %c0_9 = arith.constant 0 : index
    %c0_10 = arith.constant 0 : index
    %21 = vector.load %arg3[%c0_9, %c0_10] : memref<1x384xf32, #tpu.memory_space<vmem>>, vector<1x384xf32>
    %22 = vector.broadcast %21 : vector<1x384xf32> to vector<80x384xf32>
    %23 = arith.addf %20, %22 : vector<80x384xf32>
    %24 = vector.extract_strided_slice %23 {offsets = [0, 0], sizes = [80, 64], strides = [1, 1]} : vector<80x384xf32> to vector<80x64xf32>
    %25 = vector.extract_strided_slice %23 {offsets = [0, 128], sizes = [80, 64], strides = [1, 1]} : vector<80x384xf32> to vector<80x64xf32>
    %26 = vector.extract_strided_slice %23 {offsets = [0, 256], sizes = [80, 64], strides = [1, 1]} : vector<80x384xf32> to vector<80x64xf32>
    %c0_11 = arith.constant 0 : index
    %c0_12 = arith.constant 0 : index
    %27 = vector.load %arg4[%c0_11, %c0_12] : memref<64x384xf32, #tpu.memory_space<vmem>>, vector<64x384xf32>
    %c0_13 = arith.constant 0 : index
    %c0_14 = arith.constant 0 : index
    %28 = vector.load %arg5[%c0_13, %c0_14] : memref<1x64xf32, #tpu.memory_space<vmem>>, vector<1x64xf32>
    %29 = vector.shape_cast %28 : vector<1x64xf32> to vector<1x64xf32>
    %30 = vector.broadcast %29 : vector<1x64xf32> to vector<8x64xf32>
    %cst_15 = arith.constant 0.000000e+00 : f32
    %31 = vector.broadcast %cst_15 : f32 to vector<8x64xf32>
    %cst_16 = arith.constant dense<0.000000e+00> : vector<8x384xf32>
    %32 = tpu.matmul %31, %27, %cst_16 {dimension_numbers = #tpu.dot_dimension_numbers<[1], [0], [0], [1], [0, 0, 1, 1], [], []>} : vector<8x64xf32>, vector<64x384xf32>, vector<8x384xf32> -> vector<8x384xf32>
    %33 = vector.extract_strided_slice %24 {offsets = [0, 0], sizes = [8, 64], strides = [1, 1]} : vector<80x64xf32> to vector<8x64xf32>
    %34 = vector.extract_strided_slice %32 {offsets = [0, 0], sizes = [8, 64], strides = [1, 1]} : vector<8x384xf32> to vector<8x64xf32>
    %35 = arith.addf %33, %34 : vector<8x64xf32>
    %cst_17 = arith.constant 0.000000e+00 : f32
    %36 = vector.broadcast %cst_17 : f32 to vector<8x64xf32>
    %37 = arith.subf %36, %35 : vector<8x64xf32>
    %38 = math.exp %37 : vector<8x64xf32>
    %cst_18 = arith.constant 1.000000e+00 : f32
    %39 = vector.broadcast %cst_18 : f32 to vector<8x64xf32>
    %40 = arith.addf %39, %38 : vector<8x64xf32>
    %41 = tpu.reciprocal %40 {approx = true} : vector<8x64xf32> -> vector<8x64xf32>
    %42 = vector.extract_strided_slice %25 {offsets = [0, 0], sizes = [8, 64], strides = [1, 1]} : vector<80x64xf32> to vector<8x64xf32>
    %43 = vector.extract_strided_slice %32 {offsets = [0, 128], sizes = [8, 64], strides = [1, 1]} : vector<8x384xf32> to vector<8x64xf32>
    %44 = arith.addf %42, %43 : vector<8x64xf32>
    %cst_19 = arith.constant 0.000000e+00 : f32
    %45 = vector.broadcast %cst_19 : f32 to vector<8x64xf32>
    %46 = arith.subf %45, %44 : vector<8x64xf32>
    %47 = math.exp %46 : vector<8x64xf32>
    %cst_20 = arith.constant 1.000000e+00 : f32
    %48 = vector.broadcast %cst_20 : f32 to vector<8x64xf32>
    %49 = arith.addf %48, %47 : vector<8x64xf32>
    %50 = tpu.reciprocal %49 {approx = true} : vector<8x64xf32> -> vector<8x64xf32>
    %51 = vector.extract_strided_slice %26 {offsets = [0, 0], sizes = [8, 64], strides = [1, 1]} : vector<80x64xf32> to vector<8x64xf32>
    %52 = vector.extract_strided_slice %32 {offsets = [0, 256], sizes = [8, 64], strides = [1, 1]} : vector<8x384xf32> to vector<8x64xf32>
    %53 = arith.addf %52, %30 : vector<8x64xf32>
    %54 = arith.mulf %41, %53 : vector<8x64xf32>
    %55 = arith.addf %51, %54 : vector<8x64xf32>
    %56 = math.tanh %55 : vector<8x64xf32>
    %cst_21 = arith.constant 1.000000e+00 : f32
    %57 = vector.broadcast %cst_21 : f32 to vector<8x64xf32>
    %58 = arith.subf %57, %50 : vector<8x64xf32>
    %59 = arith.mulf %58, %56 : vector<8x64xf32>
    %60 = arith.mulf %50, %31 : vector<8x64xf32>
    %61 = arith.addf %59, %60 : vector<8x64xf32>
    %c0_22 = arith.constant 0 : index
    %c0_23 = arith.constant 0 : index
    %c0_24 = arith.constant 0 : index
    %62 = vector.load %arg6[%c0_22, %c0_23, %c0_24] : memref<10x8x64xf32, #tpu.memory_space<vmem>>, vector<1x8x64xf32>
    %63 = vector.shape_cast %62 : vector<1x8x64xf32> to vector<8x64xf32>
    %64 = vector.shape_cast %61 : vector<8x64xf32> to vector<1x8x64xf32>
    tpu.vector_store %arg6[%c0_22, %c0_23, %c0_24], %64 {strides = array<i32>} : memref<10x8x64xf32, #tpu.memory_space<vmem>>, vector<1x8x64xf32>,
    %cst_25 = arith.constant dense<0.000000e+00> : vector<8x384xf32>
    %65 = tpu.matmul %61, %27, %cst_25 {dimension_numbers = #tpu.dot_dimension_numbers<[1], [0], [0], [1], [0, 0, 1, 1], [], []>} : vector<8x64xf32>, vector<64x384xf32>, vector<8x384xf32> -> vector<8x384xf32>
    %66 = vector.extract_strided_slice %24 {offsets = [8, 0], sizes = [8, 64], strides = [1, 1]} : vector<80x64xf32> to vector<8x64xf32>
    %67 = vector.extract_strided_slice %65 {offsets = [0, 0], sizes = [8, 64], strides = [1, 1]} : vector<8x384xf32> to vector<8x64xf32>
    %68 = arith.addf %66, %67 : vector<8x64xf32>
    %cst_26 = arith.constant 0.000000e+00 : f32
    %69 = vector.broadcast %cst_26 : f32 to vector<8x64xf32>
    %70 = arith.subf %69, %68 : vector<8x64xf32>
    %71 = math.exp %70 : vector<8x64xf32>
    %cst_27 = arith.constant 1.000000e+00 : f32
    %72 = vector.broadcast %cst_27 : f32 to vector<8x64xf32>
    %73 = arith.addf %72, %71 : vector<8x64xf32>
    %74 = tpu.reciprocal %73 {approx = true} : vector<8x64xf32> -> vector<8x64xf32>
    %75 = vector.extract_strided_slice %25 {offsets = [8, 0], sizes = [8, 64], strides = [1, 1]} : vector<80x64xf32> to vector<8x64xf32>
    %76 = vector.extract_strided_slice %65 {offsets = [0, 128], sizes = [8, 64], strides = [1, 1]} : vector<8x384xf32> to vector<8x64xf32>
    %77 = arith.addf %75, %76 : vector<8x64xf32>
    %cst_28 = arith.constant 0.000000e+00 : f32
    %78 = vector.broadcast %cst_28 : f32 to vector<8x64xf32>
    %79 = arith.subf %78, %77 : vector<8x64xf32>
    %80 = math.exp %79 : vector<8x64xf32>
    %cst_29 = arith.constant 1.000000e+00 : f32
    %81 = vector.broadcast %cst_29 : f32 to vector<8x64xf32>
    %82 = arith.addf %81, %80 : vector<8x64xf32>
    %83 = tpu.reciprocal %82 {approx = true} : vector<8x64xf32> -> vector<8x64xf32>
    %84 = vector.extract_strided_slice %26 {offsets = [8, 0], sizes = [8, 64], strides = [1, 1]} : vector<80x64xf32> to vector<8x64xf32>
    %85 = vector.extract_strided_slice %65 {offsets = [0, 256], sizes = [8, 64], strides = [1, 1]} : vector<8x384xf32> to vector<8x64xf32>
    %86 = arith.addf %85, %30 : vector<8x64xf32>
    %87 = arith.mulf %74, %86 : vector<8x64xf32>
    %88 = arith.addf %84, %87 : vector<8x64xf32>
    %89 = math.tanh %88 : vector<8x64xf32>
    %cst_30 = arith.constant 1.000000e+00 : f32
    %90 = vector.broadcast %cst_30 : f32 to vector<8x64xf32>
    %91 = arith.subf %90, %83 : vector<8x64xf32>
    %92 = arith.mulf %91, %89 : vector<8x64xf32>
    %93 = arith.mulf %83, %61 : vector<8x64xf32>
    %94 = arith.addf %92, %93 : vector<8x64xf32>
    %c1 = arith.constant 1 : index
    %c0_31 = arith.constant 0 : index
    %c0_32 = arith.constant 0 : index
    %95 = vector.load %arg6[%c1, %c0_31, %c0_32] : memref<10x8x64xf32, #tpu.memory_space<vmem>>, vector<1x8x64xf32>
    %96 = vector.shape_cast %95 : vector<1x8x64xf32> to vector<8x64xf32>
    %97 = vector.shape_cast %94 : vector<8x64xf32> to vector<1x8x64xf32>
    tpu.vector_store %arg6[%c1, %c0_31, %c0_32], %97 {strides = array<i32>} : memref<10x8x64xf32, #tpu.memory_space<vmem>>, vector<1x8x64xf32>,
    %cst_33 = arith.constant dense<0.000000e+00> : vector<8x384xf32>
    %98 = tpu.matmul %94, %27, %cst_33 {dimension_numbers = #tpu.dot_dimension_numbers<[1], [0], [0], [1], [0, 0, 1, 1], [], []>} : vector<8x64xf32>, vector<64x384xf32>, vector<8x384xf32> -> vector<8x384xf32>
    %99 = vector.extract_strided_slice %24 {offsets = [16, 0], sizes = [8, 64], strides = [1, 1]} : vector<80x64xf32> to vector<8x64xf32>
    %100 = vector.extract_strided_slice %98 {offsets = [0, 0], sizes = [8, 64], strides = [1, 1]} : vector<8x384xf32> to vector<8x64xf32>
    %101 = arith.addf %99, %100 : vector<8x64xf32>
    %cst_34 = arith.constant 0.000000e+00 : f32
    %102 = vector.broadcast %cst_34 : f32 to vector<8x64xf32>
    %103 = arith.subf %102, %101 : vector<8x64xf32>
    %104 = math.exp %103 : vector<8x64xf32>
    %cst_35 = arith.constant 1.000000e+00 : f32
    %105 = vector.broadcast %cst_35 : f32 to vector<8x64xf32>
    %106 = arith.addf %105, %104 : vector<8x64xf32>
    %107 = tpu.reciprocal %106 {approx = true} : vector<8x64xf32> -> vector<8x64xf32>
    %108 = vector.extract_strided_slice %25 {offsets = [16, 0], sizes = [8, 64], strides = [1, 1]} : vector<80x64xf32> to vector<8x64xf32>
    %109 = vector.extract_strided_slice %98 {offsets = [0, 128], sizes = [8, 64], strides = [1, 1]} : vector<8x384xf32> to vector<8x64xf32>
    %110 = arith.addf %108, %109 : vector<8x64xf32>
    %cst_36 = arith.constant 0.000000e+00 : f32
    %111 = vector.broadcast %cst_36 : f32 to vector<8x64xf32>
    %112 = arith.subf %111, %110 : vector<8x64xf32>
    %113 = math.exp %112 : vector<8x64xf32>
    %cst_37 = arith.constant 1.000000e+00 : f32
    %114 = vector.broadcast %cst_37 : f32 to vector<8x64xf32>
    %115 = arith.addf %114, %113 : vector<8x64xf32>
    %116 = tpu.reciprocal %115 {approx = true} : vector<8x64xf32> -> vector<8x64xf32>
    %117 = vector.extract_strided_slice %26 {offsets = [16, 0], sizes = [8, 64], strides = [1, 1]} : vector<80x64xf32> to vector<8x64xf32>
    %118 = vector.extract_strided_slice %98 {offsets = [0, 256], sizes = [8, 64], strides = [1, 1]} : vector<8x384xf32> to vector<8x64xf32>
    %119 = arith.addf %118, %30 : vector<8x64xf32>
    %120 = arith.mulf %107, %119 : vector<8x64xf32>
    %121 = arith.addf %117, %120 : vector<8x64xf32>
    %122 = math.tanh %121 : vector<8x64xf32>
    %cst_38 = arith.constant 1.000000e+00 : f32
    %123 = vector.broadcast %cst_38 : f32 to vector<8x64xf32>
    %124 = arith.subf %123, %116 : vector<8x64xf32>
    %125 = arith.mulf %124, %122 : vector<8x64xf32>
    %126 = arith.mulf %116, %94 : vector<8x64xf32>
    %127 = arith.addf %125, %126 : vector<8x64xf32>
    %c2 = arith.constant 2 : index
    %c0_39 = arith.constant 0 : index
    %c0_40 = arith.constant 0 : index
    %128 = vector.load %arg6[%c2, %c0_39, %c0_40] : memref<10x8x64xf32, #tpu.memory_space<vmem>>, vector<1x8x64xf32>
    %129 = vector.shape_cast %128 : vector<1x8x64xf32> to vector<8x64xf32>
    %130 = vector.shape_cast %127 : vector<8x64xf32> to vector<1x8x64xf32>
    tpu.vector_store %arg6[%c2, %c0_39, %c0_40], %130 {strides = array<i32>} : memref<10x8x64xf32, #tpu.memory_space<vmem>>, vector<1x8x64xf32>,
    %cst_41 = arith.constant dense<0.000000e+00> : vector<8x384xf32>
    %131 = tpu.matmul %127, %27, %cst_41 {dimension_numbers = #tpu.dot_dimension_numbers<[1], [0], [0], [1], [0, 0, 1, 1], [], []>} : vector<8x64xf32>, vector<64x384xf32>, vector<8x384xf32> -> vector<8x384xf32>
    %132 = vector.extract_strided_slice %24 {offsets = [24, 0], sizes = [8, 64], strides = [1, 1]} : vector<80x64xf32> to vector<8x64xf32>
    %133 = vector.extract_strided_slice %131 {offsets = [0, 0], sizes = [8, 64], strides = [1, 1]} : vector<8x384xf32> to vector<8x64xf32>
    %134 = arith.addf %132, %133 : vector<8x64xf32>
    %cst_42 = arith.constant 0.000000e+00 : f32
    %135 = vector.broadcast %cst_42 : f32 to vector<8x64xf32>
    %136 = arith.subf %135, %134 : vector<8x64xf32>
    %137 = math.exp %136 : vector<8x64xf32>
    %cst_43 = arith.constant 1.000000e+00 : f32
    %138 = vector.broadcast %cst_43 : f32 to vector<8x64xf32>
    %139 = arith.addf %138, %137 : vector<8x64xf32>
    %140 = tpu.reciprocal %139 {approx = true} : vector<8x64xf32> -> vector<8x64xf32>
    %141 = vector.extract_strided_slice %25 {offsets = [24, 0], sizes = [8, 64], strides = [1, 1]} : vector<80x64xf32> to vector<8x64xf32>
    %142 = vector.extract_strided_slice %131 {offsets = [0, 128], sizes = [8, 64], strides = [1, 1]} : vector<8x384xf32> to vector<8x64xf32>
    %143 = arith.addf %141, %142 : vector<8x64xf32>
    %cst_44 = arith.constant 0.000000e+00 : f32
    %144 = vector.broadcast %cst_44 : f32 to vector<8x64xf32>
    %145 = arith.subf %144, %143 : vector<8x64xf32>
    %146 = math.exp %145 : vector<8x64xf32>
    %cst_45 = arith.constant 1.000000e+00 : f32
    %147 = vector.broadcast %cst_45 : f32 to vector<8x64xf32>
    %148 = arith.addf %147, %146 : vector<8x64xf32>
    %149 = tpu.reciprocal %148 {approx = true} : vector<8x64xf32> -> vector<8x64xf32>
    %150 = vector.extract_strided_slice %26 {offsets = [24, 0], sizes = [8, 64], strides = [1, 1]} : vector<80x64xf32> to vector<8x64xf32>
    %151 = vector.extract_strided_slice %131 {offsets = [0, 256], sizes = [8, 64], strides = [1, 1]} : vector<8x384xf32> to vector<8x64xf32>
    %152 = arith.addf %151, %30 : vector<8x64xf32>
    %153 = arith.mulf %140, %152 : vector<8x64xf32>
    %154 = arith.addf %150, %153 : vector<8x64xf32>
    %155 = math.tanh %154 : vector<8x64xf32>
    %cst_46 = arith.constant 1.000000e+00 : f32
    %156 = vector.broadcast %cst_46 : f32 to vector<8x64xf32>
    %157 = arith.subf %156, %149 : vector<8x64xf32>
    %158 = arith.mulf %157, %155 : vector<8x64xf32>
    %159 = arith.mulf %149, %127 : vector<8x64xf32>
    %160 = arith.addf %158, %159 : vector<8x64xf32>
    %c3 = arith.constant 3 : index
    %c0_47 = arith.constant 0 : index
    %c0_48 = arith.constant 0 : index
    %161 = vector.load %arg6[%c3, %c0_47, %c0_48] : memref<10x8x64xf32, #tpu.memory_space<vmem>>, vector<1x8x64xf32>
    %162 = vector.shape_cast %161 : vector<1x8x64xf32> to vector<8x64xf32>
    %163 = vector.shape_cast %160 : vector<8x64xf32> to vector<1x8x64xf32>
    tpu.vector_store %arg6[%c3, %c0_47, %c0_48], %163 {strides = array<i32>} : memref<10x8x64xf32, #tpu.memory_space<vmem>>, vector<1x8x64xf32>,
    %cst_49 = arith.constant dense<0.000000e+00> : vector<8x384xf32>
    %164 = tpu.matmul %160, %27, %cst_49 {dimension_numbers = #tpu.dot_dimension_numbers<[1], [0], [0], [1], [0, 0, 1, 1], [], []>} : vector<8x64xf32>, vector<64x384xf32>, vector<8x384xf32> -> vector<8x384xf32>
    %165 = vector.extract_strided_slice %24 {offsets = [32, 0], sizes = [8, 64], strides = [1, 1]} : vector<80x64xf32> to vector<8x64xf32>
    %166 = vector.extract_strided_slice %164 {offsets = [0, 0], sizes = [8, 64], strides = [1, 1]} : vector<8x384xf32> to vector<8x64xf32>
    %167 = arith.addf %165, %166 : vector<8x64xf32>
    %cst_50 = arith.constant 0.000000e+00 : f32
    %168 = vector.broadcast %cst_50 : f32 to vector<8x64xf32>
    %169 = arith.subf %168, %167 : vector<8x64xf32>
    %170 = math.exp %169 : vector<8x64xf32>
    %cst_51 = arith.constant 1.000000e+00 : f32
    %171 = vector.broadcast %cst_51 : f32 to vector<8x64xf32>
    %172 = arith.addf %171, %170 : vector<8x64xf32>
    %173 = tpu.reciprocal %172 {approx = true} : vector<8x64xf32> -> vector<8x64xf32>
    %174 = vector.extract_strided_slice %25 {offsets = [32, 0], sizes = [8, 64], strides = [1, 1]} : vector<80x64xf32> to vector<8x64xf32>
    %175 = vector.extract_strided_slice %164 {offsets = [0, 128], sizes = [8, 64], strides = [1, 1]} : vector<8x384xf32> to vector<8x64xf32>
    %176 = arith.addf %174, %175 : vector<8x64xf32>
    %cst_52 = arith.constant 0.000000e+00 : f32
    %177 = vector.broadcast %cst_52 : f32 to vector<8x64xf32>
    %178 = arith.subf %177, %176 : vector<8x64xf32>
    %179 = math.exp %178 : vector<8x64xf32>
    %cst_53 = arith.constant 1.000000e+00 : f32
    %180 = vector.broadcast %cst_53 : f32 to vector<8x64xf32>
    %181 = arith.addf %180, %179 : vector<8x64xf32>
    %182 = tpu.reciprocal %181 {approx = true} : vector<8x64xf32> -> vector<8x64xf32>
    %183 = vector.extract_strided_slice %26 {offsets = [32, 0], sizes = [8, 64], strides = [1, 1]} : vector<80x64xf32> to vector<8x64xf32>
    %184 = vector.extract_strided_slice %164 {offsets = [0, 256], sizes = [8, 64], strides = [1, 1]} : vector<8x384xf32> to vector<8x64xf32>
    %185 = arith.addf %184, %30 : vector<8x64xf32>
    %186 = arith.mulf %173, %185 : vector<8x64xf32>
    %187 = arith.addf %183, %186 : vector<8x64xf32>
    %188 = math.tanh %187 : vector<8x64xf32>
    %cst_54 = arith.constant 1.000000e+00 : f32
    %189 = vector.broadcast %cst_54 : f32 to vector<8x64xf32>
    %190 = arith.subf %189, %182 : vector<8x64xf32>
    %191 = arith.mulf %190, %188 : vector<8x64xf32>
    %192 = arith.mulf %182, %160 : vector<8x64xf32>
    %193 = arith.addf %191, %192 : vector<8x64xf32>
    %c4 = arith.constant 4 : index
    %c0_55 = arith.constant 0 : index
    %c0_56 = arith.constant 0 : index
    %194 = vector.load %arg6[%c4, %c0_55, %c0_56] : memref<10x8x64xf32, #tpu.memory_space<vmem>>, vector<1x8x64xf32>
    %195 = vector.shape_cast %194 : vector<1x8x64xf32> to vector<8x64xf32>
    %196 = vector.shape_cast %193 : vector<8x64xf32> to vector<1x8x64xf32>
    tpu.vector_store %arg6[%c4, %c0_55, %c0_56], %196 {strides = array<i32>} : memref<10x8x64xf32, #tpu.memory_space<vmem>>, vector<1x8x64xf32>,
    %cst_57 = arith.constant dense<0.000000e+00> : vector<8x384xf32>
    %197 = tpu.matmul %193, %27, %cst_57 {dimension_numbers = #tpu.dot_dimension_numbers<[1], [0], [0], [1], [0, 0, 1, 1], [], []>} : vector<8x64xf32>, vector<64x384xf32>, vector<8x384xf32> -> vector<8x384xf32>
    %198 = vector.extract_strided_slice %24 {offsets = [40, 0], sizes = [8, 64], strides = [1, 1]} : vector<80x64xf32> to vector<8x64xf32>
    %199 = vector.extract_strided_slice %197 {offsets = [0, 0], sizes = [8, 64], strides = [1, 1]} : vector<8x384xf32> to vector<8x64xf32>
    %200 = arith.addf %198, %199 : vector<8x64xf32>
    %cst_58 = arith.constant 0.000000e+00 : f32
    %201 = vector.broadcast %cst_58 : f32 to vector<8x64xf32>
    %202 = arith.subf %201, %200 : vector<8x64xf32>
    %203 = math.exp %202 : vector<8x64xf32>
    %cst_59 = arith.constant 1.000000e+00 : f32
    %204 = vector.broadcast %cst_59 : f32 to vector<8x64xf32>
    %205 = arith.addf %204, %203 : vector<8x64xf32>
    %206 = tpu.reciprocal %205 {approx = true} : vector<8x64xf32> -> vector<8x64xf32>
    %207 = vector.extract_strided_slice %25 {offsets = [40, 0], sizes = [8, 64], strides = [1, 1]} : vector<80x64xf32> to vector<8x64xf32>
    %208 = vector.extract_strided_slice %197 {offsets = [0, 128], sizes = [8, 64], strides = [1, 1]} : vector<8x384xf32> to vector<8x64xf32>
    %209 = arith.addf %207, %208 : vector<8x64xf32>
    %cst_60 = arith.constant 0.000000e+00 : f32
    %210 = vector.broadcast %cst_60 : f32 to vector<8x64xf32>
    %211 = arith.subf %210, %209 : vector<8x64xf32>
    %212 = math.exp %211 : vector<8x64xf32>
    %cst_61 = arith.constant 1.000000e+00 : f32
    %213 = vector.broadcast %cst_61 : f32 to vector<8x64xf32>
    %214 = arith.addf %213, %212 : vector<8x64xf32>
    %215 = tpu.reciprocal %214 {approx = true} : vector<8x64xf32> -> vector<8x64xf32>
    %216 = vector.extract_strided_slice %26 {offsets = [40, 0], sizes = [8, 64], strides = [1, 1]} : vector<80x64xf32> to vector<8x64xf32>
    %217 = vector.extract_strided_slice %197 {offsets = [0, 256], sizes = [8, 64], strides = [1, 1]} : vector<8x384xf32> to vector<8x64xf32>
    %218 = arith.addf %217, %30 : vector<8x64xf32>
    %219 = arith.mulf %206, %218 : vector<8x64xf32>
    %220 = arith.addf %216, %219 : vector<8x64xf32>
    %221 = math.tanh %220 : vector<8x64xf32>
    %cst_62 = arith.constant 1.000000e+00 : f32
    %222 = vector.broadcast %cst_62 : f32 to vector<8x64xf32>
    %223 = arith.subf %222, %215 : vector<8x64xf32>
    %224 = arith.mulf %223, %221 : vector<8x64xf32>
    %225 = arith.mulf %215, %193 : vector<8x64xf32>
    %226 = arith.addf %224, %225 : vector<8x64xf32>
    %c5 = arith.constant 5 : index
    %c0_63 = arith.constant 0 : index
    %c0_64 = arith.constant 0 : index
    %227 = vector.load %arg6[%c5, %c0_63, %c0_64] : memref<10x8x64xf32, #tpu.memory_space<vmem>>, vector<1x8x64xf32>
    %228 = vector.shape_cast %227 : vector<1x8x64xf32> to vector<8x64xf32>
    %229 = vector.shape_cast %226 : vector<8x64xf32> to vector<1x8x64xf32>
    tpu.vector_store %arg6[%c5, %c0_63, %c0_64], %229 {strides = array<i32>} : memref<10x8x64xf32, #tpu.memory_space<vmem>>, vector<1x8x64xf32>,
    %cst_65 = arith.constant dense<0.000000e+00> : vector<8x384xf32>
    %230 = tpu.matmul %226, %27, %cst_65 {dimension_numbers = #tpu.dot_dimension_numbers<[1], [0], [0], [1], [0, 0, 1, 1], [], []>} : vector<8x64xf32>, vector<64x384xf32>, vector<8x384xf32> -> vector<8x384xf32>
    %231 = vector.extract_strided_slice %24 {offsets = [48, 0], sizes = [8, 64], strides = [1, 1]} : vector<80x64xf32> to vector<8x64xf32>
    %232 = vector.extract_strided_slice %230 {offsets = [0, 0], sizes = [8, 64], strides = [1, 1]} : vector<8x384xf32> to vector<8x64xf32>
    %233 = arith.addf %231, %232 : vector<8x64xf32>
    %cst_66 = arith.constant 0.000000e+00 : f32
    %234 = vector.broadcast %cst_66 : f32 to vector<8x64xf32>
    %235 = arith.subf %234, %233 : vector<8x64xf32>
    %236 = math.exp %235 : vector<8x64xf32>
    %cst_67 = arith.constant 1.000000e+00 : f32
    %237 = vector.broadcast %cst_67 : f32 to vector<8x64xf32>
    %238 = arith.addf %237, %236 : vector<8x64xf32>
    %239 = tpu.reciprocal %238 {approx = true} : vector<8x64xf32> -> vector<8x64xf32>
    %240 = vector.extract_strided_slice %25 {offsets = [48, 0], sizes = [8, 64], strides = [1, 1]} : vector<80x64xf32> to vector<8x64xf32>
    %241 = vector.extract_strided_slice %230 {offsets = [0, 128], sizes = [8, 64], strides = [1, 1]} : vector<8x384xf32> to vector<8x64xf32>
    %242 = arith.addf %240, %241 : vector<8x64xf32>
    %cst_68 = arith.constant 0.000000e+00 : f32
    %243 = vector.broadcast %cst_68 : f32 to vector<8x64xf32>
    %244 = arith.subf %243, %242 : vector<8x64xf32>
    %245 = math.exp %244 : vector<8x64xf32>
    %cst_69 = arith.constant 1.000000e+00 : f32
    %246 = vector.broadcast %cst_69 : f32 to vector<8x64xf32>
    %247 = arith.addf %246, %245 : vector<8x64xf32>
    %248 = tpu.reciprocal %247 {approx = true} : vector<8x64xf32> -> vector<8x64xf32>
    %249 = vector.extract_strided_slice %26 {offsets = [48, 0], sizes = [8, 64], strides = [1, 1]} : vector<80x64xf32> to vector<8x64xf32>
    %250 = vector.extract_strided_slice %230 {offsets = [0, 256], sizes = [8, 64], strides = [1, 1]} : vector<8x384xf32> to vector<8x64xf32>
    %251 = arith.addf %250, %30 : vector<8x64xf32>
    %252 = arith.mulf %239, %251 : vector<8x64xf32>
    %253 = arith.addf %249, %252 : vector<8x64xf32>
    %254 = math.tanh %253 : vector<8x64xf32>
    %cst_70 = arith.constant 1.000000e+00 : f32
    %255 = vector.broadcast %cst_70 : f32 to vector<8x64xf32>
    %256 = arith.subf %255, %248 : vector<8x64xf32>
    %257 = arith.mulf %256, %254 : vector<8x64xf32>
    %258 = arith.mulf %248, %226 : vector<8x64xf32>
    %259 = arith.addf %257, %258 : vector<8x64xf32>
    %c6 = arith.constant 6 : index
    %c0_71 = arith.constant 0 : index
    %c0_72 = arith.constant 0 : index
    %260 = vector.load %arg6[%c6, %c0_71, %c0_72] : memref<10x8x64xf32, #tpu.memory_space<vmem>>, vector<1x8x64xf32>
    %261 = vector.shape_cast %260 : vector<1x8x64xf32> to vector<8x64xf32>
    %262 = vector.shape_cast %259 : vector<8x64xf32> to vector<1x8x64xf32>
    tpu.vector_store %arg6[%c6, %c0_71, %c0_72], %262 {strides = array<i32>} : memref<10x8x64xf32, #tpu.memory_space<vmem>>, vector<1x8x64xf32>,
    %cst_73 = arith.constant dense<0.000000e+00> : vector<8x384xf32>
    %263 = tpu.matmul %259, %27, %cst_73 {dimension_numbers = #tpu.dot_dimension_numbers<[1], [0], [0], [1], [0, 0, 1, 1], [], []>} : vector<8x64xf32>, vector<64x384xf32>, vector<8x384xf32> -> vector<8x384xf32>
    %264 = vector.extract_strided_slice %24 {offsets = [56, 0], sizes = [8, 64], strides = [1, 1]} : vector<80x64xf32> to vector<8x64xf32>
    %265 = vector.extract_strided_slice %263 {offsets = [0, 0], sizes = [8, 64], strides = [1, 1]} : vector<8x384xf32> to vector<8x64xf32>
    %266 = arith.addf %264, %265 : vector<8x64xf32>
    %cst_74 = arith.constant 0.000000e+00 : f32
    %267 = vector.broadcast %cst_74 : f32 to vector<8x64xf32>
    %268 = arith.subf %267, %266 : vector<8x64xf32>
    %269 = math.exp %268 : vector<8x64xf32>
    %cst_75 = arith.constant 1.000000e+00 : f32
    %270 = vector.broadcast %cst_75 : f32 to vector<8x64xf32>
    %271 = arith.addf %270, %269 : vector<8x64xf32>
    %272 = tpu.reciprocal %271 {approx = true} : vector<8x64xf32> -> vector<8x64xf32>
    %273 = vector.extract_strided_slice %25 {offsets = [56, 0], sizes = [8, 64], strides = [1, 1]} : vector<80x64xf32> to vector<8x64xf32>
    %274 = vector.extract_strided_slice %263 {offsets = [0, 128], sizes = [8, 64], strides = [1, 1]} : vector<8x384xf32> to vector<8x64xf32>
    %275 = arith.addf %273, %274 : vector<8x64xf32>
    %cst_76 = arith.constant 0.000000e+00 : f32
    %276 = vector.broadcast %cst_76 : f32 to vector<8x64xf32>
    %277 = arith.subf %276, %275 : vector<8x64xf32>
    %278 = math.exp %277 : vector<8x64xf32>
    %cst_77 = arith.constant 1.000000e+00 : f32
    %279 = vector.broadcast %cst_77 : f32 to vector<8x64xf32>
    %280 = arith.addf %279, %278 : vector<8x64xf32>
    %281 = tpu.reciprocal %280 {approx = true} : vector<8x64xf32> -> vector<8x64xf32>
    %282 = vector.extract_strided_slice %26 {offsets = [56, 0], sizes = [8, 64], strides = [1, 1]} : vector<80x64xf32> to vector<8x64xf32>
    %283 = vector.extract_strided_slice %263 {offsets = [0, 256], sizes = [8, 64], strides = [1, 1]} : vector<8x384xf32> to vector<8x64xf32>
    %284 = arith.addf %283, %30 : vector<8x64xf32>
    %285 = arith.mulf %272, %284 : vector<8x64xf32>
    %286 = arith.addf %282, %285 : vector<8x64xf32>
    %287 = math.tanh %286 : vector<8x64xf32>
    %cst_78 = arith.constant 1.000000e+00 : f32
    %288 = vector.broadcast %cst_78 : f32 to vector<8x64xf32>
    %289 = arith.subf %288, %281 : vector<8x64xf32>
    %290 = arith.mulf %289, %287 : vector<8x64xf32>
    %291 = arith.mulf %281, %259 : vector<8x64xf32>
    %292 = arith.addf %290, %291 : vector<8x64xf32>
    %c7 = arith.constant 7 : index
    %c0_79 = arith.constant 0 : index
    %c0_80 = arith.constant 0 : index
    %293 = vector.load %arg6[%c7, %c0_79, %c0_80] : memref<10x8x64xf32, #tpu.memory_space<vmem>>, vector<1x8x64xf32>
    %294 = vector.shape_cast %293 : vector<1x8x64xf32> to vector<8x64xf32>
    %295 = vector.shape_cast %292 : vector<8x64xf32> to vector<1x8x64xf32>
    tpu.vector_store %arg6[%c7, %c0_79, %c0_80], %295 {strides = array<i32>} : memref<10x8x64xf32, #tpu.memory_space<vmem>>, vector<1x8x64xf32>,
    %cst_81 = arith.constant dense<0.000000e+00> : vector<8x384xf32>
    %296 = tpu.matmul %292, %27, %cst_81 {dimension_numbers = #tpu.dot_dimension_numbers<[1], [0], [0], [1], [0, 0, 1, 1], [], []>} : vector<8x64xf32>, vector<64x384xf32>, vector<8x384xf32> -> vector<8x384xf32>
    %297 = vector.extract_strided_slice %24 {offsets = [64, 0], sizes = [8, 64], strides = [1, 1]} : vector<80x64xf32> to vector<8x64xf32>
    %298 = vector.extract_strided_slice %296 {offsets = [0, 0], sizes = [8, 64], strides = [1, 1]} : vector<8x384xf32> to vector<8x64xf32>
    %299 = arith.addf %297, %298 : vector<8x64xf32>
    %cst_82 = arith.constant 0.000000e+00 : f32
    %300 = vector.broadcast %cst_82 : f32 to vector<8x64xf32>
    %301 = arith.subf %300, %299 : vector<8x64xf32>
    %302 = math.exp %301 : vector<8x64xf32>
    %cst_83 = arith.constant 1.000000e+00 : f32
    %303 = vector.broadcast %cst_83 : f32 to vector<8x64xf32>
    %304 = arith.addf %303, %302 : vector<8x64xf32>
    %305 = tpu.reciprocal %304 {approx = true} : vector<8x64xf32> -> vector<8x64xf32>
    %306 = vector.extract_strided_slice %25 {offsets = [64, 0], sizes = [8, 64], strides = [1, 1]} : vector<80x64xf32> to vector<8x64xf32>
    %307 = vector.extract_strided_slice %296 {offsets = [0, 128], sizes = [8, 64], strides = [1, 1]} : vector<8x384xf32> to vector<8x64xf32>
    %308 = arith.addf %306, %307 : vector<8x64xf32>
    %cst_84 = arith.constant 0.000000e+00 : f32
    %309 = vector.broadcast %cst_84 : f32 to vector<8x64xf32>
    %310 = arith.subf %309, %308 : vector<8x64xf32>
    %311 = math.exp %310 : vector<8x64xf32>
    %cst_85 = arith.constant 1.000000e+00 : f32
    %312 = vector.broadcast %cst_85 : f32 to vector<8x64xf32>
    %313 = arith.addf %312, %311 : vector<8x64xf32>
    %314 = tpu.reciprocal %313 {approx = true} : vector<8x64xf32> -> vector<8x64xf32>
    %315 = vector.extract_strided_slice %26 {offsets = [64, 0], sizes = [8, 64], strides = [1, 1]} : vector<80x64xf32> to vector<8x64xf32>
    %316 = vector.extract_strided_slice %296 {offsets = [0, 256], sizes = [8, 64], strides = [1, 1]} : vector<8x384xf32> to vector<8x64xf32>
    %317 = arith.addf %316, %30 : vector<8x64xf32>
    %318 = arith.mulf %305, %317 : vector<8x64xf32>
    %319 = arith.addf %315, %318 : vector<8x64xf32>
    %320 = math.tanh %319 : vector<8x64xf32>
    %cst_86 = arith.constant 1.000000e+00 : f32
    %321 = vector.broadcast %cst_86 : f32 to vector<8x64xf32>
    %322 = arith.subf %321, %314 : vector<8x64xf32>
    %323 = arith.mulf %322, %320 : vector<8x64xf32>
    %324 = arith.mulf %314, %292 : vector<8x64xf32>
    %325 = arith.addf %323, %324 : vector<8x64xf32>
    %c8 = arith.constant 8 : index
    %c0_87 = arith.constant 0 : index
    %c0_88 = arith.constant 0 : index
    %326 = vector.load %arg6[%c8, %c0_87, %c0_88] : memref<10x8x64xf32, #tpu.memory_space<vmem>>, vector<1x8x64xf32>
    %327 = vector.shape_cast %326 : vector<1x8x64xf32> to vector<8x64xf32>
    %328 = vector.shape_cast %325 : vector<8x64xf32> to vector<1x8x64xf32>
    tpu.vector_store %arg6[%c8, %c0_87, %c0_88], %328 {strides = array<i32>} : memref<10x8x64xf32, #tpu.memory_space<vmem>>, vector<1x8x64xf32>,
    %cst_89 = arith.constant dense<0.000000e+00> : vector<8x384xf32>
    %329 = tpu.matmul %325, %27, %cst_89 {dimension_numbers = #tpu.dot_dimension_numbers<[1], [0], [0], [1], [0, 0, 1, 1], [], []>} : vector<8x64xf32>, vector<64x384xf32>, vector<8x384xf32> -> vector<8x384xf32>
    %330 = vector.extract_strided_slice %24 {offsets = [72, 0], sizes = [8, 64], strides = [1, 1]} : vector<80x64xf32> to vector<8x64xf32>
    %331 = vector.extract_strided_slice %329 {offsets = [0, 0], sizes = [8, 64], strides = [1, 1]} : vector<8x384xf32> to vector<8x64xf32>
    %332 = arith.addf %330, %331 : vector<8x64xf32>
    %cst_90 = arith.constant 0.000000e+00 : f32
    %333 = vector.broadcast %cst_90 : f32 to vector<8x64xf32>
    %334 = arith.subf %333, %332 : vector<8x64xf32>
    %335 = math.exp %334 : vector<8x64xf32>
    %cst_91 = arith.constant 1.000000e+00 : f32
    %336 = vector.broadcast %cst_91 : f32 to vector<8x64xf32>
    %337 = arith.addf %336, %335 : vector<8x64xf32>
    %338 = tpu.reciprocal %337 {approx = true} : vector<8x64xf32> -> vector<8x64xf32>
    %339 = vector.extract_strided_slice %25 {offsets = [72, 0], sizes = [8, 64], strides = [1, 1]} : vector<80x64xf32> to vector<8x64xf32>
    %340 = vector.extract_strided_slice %329 {offsets = [0, 128], sizes = [8, 64], strides = [1, 1]} : vector<8x384xf32> to vector<8x64xf32>
    %341 = arith.addf %339, %340 : vector<8x64xf32>
    %cst_92 = arith.constant 0.000000e+00 : f32
    %342 = vector.broadcast %cst_92 : f32 to vector<8x64xf32>
    %343 = arith.subf %342, %341 : vector<8x64xf32>
    %344 = math.exp %343 : vector<8x64xf32>
    %cst_93 = arith.constant 1.000000e+00 : f32
    %345 = vector.broadcast %cst_93 : f32 to vector<8x64xf32>
    %346 = arith.addf %345, %344 : vector<8x64xf32>
    %347 = tpu.reciprocal %346 {approx = true} : vector<8x64xf32> -> vector<8x64xf32>
    %348 = vector.extract_strided_slice %26 {offsets = [72, 0], sizes = [8, 64], strides = [1, 1]} : vector<80x64xf32> to vector<8x64xf32>
    %349 = vector.extract_strided_slice %329 {offsets = [0, 256], sizes = [8, 64], strides = [1, 1]} : vector<8x384xf32> to vector<8x64xf32>
    %350 = arith.addf %349, %30 : vector<8x64xf32>
    %351 = arith.mulf %338, %350 : vector<8x64xf32>
    %352 = arith.addf %348, %351 : vector<8x64xf32>
    %353 = math.tanh %352 : vector<8x64xf32>
    %cst_94 = arith.constant 1.000000e+00 : f32
    %354 = vector.broadcast %cst_94 : f32 to vector<8x64xf32>
    %355 = arith.subf %354, %347 : vector<8x64xf32>
    %356 = arith.mulf %355, %353 : vector<8x64xf32>
    %357 = arith.mulf %347, %325 : vector<8x64xf32>
    %358 = arith.addf %356, %357 : vector<8x64xf32>
    %c9 = arith.constant 9 : index
    %c0_95 = arith.constant 0 : index
    %c0_96 = arith.constant 0 : index
    %359 = vector.load %arg6[%c9, %c0_95, %c0_96] : memref<10x8x64xf32, #tpu.memory_space<vmem>>, vector<1x8x64xf32>
    %360 = vector.shape_cast %359 : vector<1x8x64xf32> to vector<8x64xf32>
    %361 = vector.shape_cast %358 : vector<8x64xf32> to vector<1x8x64xf32>
    tpu.vector_store %arg6[%c9, %c0_95, %c0_96], %361 {strides = array<i32>} : memref<10x8x64xf32, #tpu.memory_space<vmem>>, vector<1x8x64xf32>,
    %362 = vector.extract_strided_slice %358 {offsets = [0, 0], sizes = [8, 32], strides = [1, 1]} : vector<8x64xf32> to vector<8x32xf32>
    %c0_97 = arith.constant 0 : index
    %c0_98 = arith.constant 0 : index
    %c0_99 = arith.constant 0 : index
    %363 = vector.load %arg7[%c0_97, %c0_98, %c0_99] : memref<2x8x32xf32, #tpu.memory_space<vmem>>, vector<1x8x32xf32>
    %364 = vector.shape_cast %363 : vector<1x8x32xf32> to vector<8x32xf32>
    %365 = vector.shape_cast %362 : vector<8x32xf32> to vector<1x8x32xf32>
    tpu.vector_store %arg7[%c0_97, %c0_98, %c0_99], %365 {strides = array<i32>} : memref<2x8x32xf32, #tpu.memory_space<vmem>>, vector<1x8x32xf32>,
    %366 = vector.extract_strided_slice %358 {offsets = [0, 32], sizes = [8, 32], strides = [1, 1]} : vector<8x64xf32> to vector<8x32xf32>
    %c1_100 = arith.constant 1 : index
    %c0_101 = arith.constant 0 : index
    %c0_102 = arith.constant 0 : index
    %367 = vector.load %arg7[%c1_100, %c0_101, %c0_102] : memref<2x8x32xf32, #tpu.memory_space<vmem>>, vector<1x8x32xf32>
    %368 = vector.shape_cast %367 : vector<1x8x32xf32> to vector<8x32xf32>
    %369 = vector.shape_cast %366 : vector<8x32xf32> to vector<1x8x32xf32>
    tpu.vector_store %arg7[%c1_100, %c0_101, %c0_102], %369 {strides = array<i32>} : memref<2x8x32xf32, #tpu.memory_space<vmem>>, vector<1x8x32xf32>,
    return
  }
}

</mosaic_0001>

<llo_original>
// kernel: text_encoder_forward.1
$region0: #{text_encoder_forward.1}
  #allocation0 [shape = 'u32[]', space=smem, size = 0x4, offset = 0x4, fixed_abs, tag = 'smem constant byte address 0x4 - core index']
  #allocation1 [shape = 'u32[144,128]{1,0:T(1,128)}', space=vmem, size = 0x12000, scoped, tag = 'internal scratch']
  %s0 = inlined_call_operand.vmem [shape: s32[80,2], index: 0, kind: input, shape index: {}]
  %s1 = inlined_call_operand.hbm [shape: f32[100,64], index: 1, kind: input, shape index: {}]
  %s2 = inlined_call_operand.hbm [shape: f32[64,384], index: 2, kind: input, shape index: {}]
  %s3 = inlined_call_operand.vmem [shape: f32[1,384], index: 3, kind: input, shape index: {}]
  %s4 = inlined_call_operand.vmem [shape: f32[64,384], index: 4, kind: input, shape index: {}]
  %s5 = inlined_call_operand.vmem [shape: f32[1,64], index: 5, kind: input, shape index: {}]
  %s6 = inlined_call_operand.vmem [shape: f32[10,8,64], index: 6, kind: output, shape index: {0}]
  %s7 = inlined_call_operand.hbm [shape: f32[2,8,32], index: 7, kind: output, shape index: {1}]
  %8 = xla_tuple %s6, %s7
  %s9 = sld [smem:[#allocation0]]
  $region50: #{text_encoder_forward.1} parent=0
    _
  %s11 = ssub.s32 1, %s9
  %s12 = scalar_select 0, %s11, %s9
  $region1: #{text_encoder_forward.1} parent=0
    #allocation2 [shape = 'u8[53248]{0}', space=vmem, size = 0xd000, scoped, tag = 'input window, operand 1, single buffered']
    #allocation3 [shape = 's32[1]{0}', space=sflag, size = 0x4, scoped, tag = 'scoped memory for text_encoder_forward.1']
    #allocation4 [shape = 's32[1]{0}', space=sflag, size = 0x4, scoped, tag = 'scoped memory for text_encoder_forward.1']
    #allocation5 [shape = 'u8[98304]{0}', space=vmem, size = 0x18000, scoped, tag = 'input window, operand 2, single buffered']
    #allocation6 [shape = 's32[1]{0}', space=sflag, size = 0x4, scoped, tag = 'scoped memory for text_encoder_forward.1']
    #allocation7 [shape = 'u8[8192]{0}', space=vmem, size = 0x2000, scoped, tag = 'output window, operand 1, single buffered']
    %13 = vsyncpa [#allocation3], 0
    %14 = vsyncpa [#allocation6], 0
    %15 = vsyncpa [#allocation4], 0
    // Predicated region
    $region2: #{text_encoder_forward.1} parent=1 // pred_check
      _
    $region3: #{text_encoder_forward.1} parent=1 // pred_check_branch
      %17 = sbr.rel (0) target = $region5
    $region4: #{text_encoder_forward.1} parent=1 // pred_region
      _
    $region5: #{text_encoder_forward.1} parent=1 // pred_fallthru
      _
    // Predicated region
    $region6: #{text_encoder_forward.1} parent=1 // pred_check
      _
    $region7: #{text_encoder_forward.1} parent=1 // pred_check_branch
      %19 = sbr.rel (0) target = $region9
    $region8: #{text_encoder_forward.1} parent=1 // pred_region
      %s21 = ssub.s32 1664, 1664
      %22 = vsyncadd [#allocation3], %s21
      %s23 = sshll.u32 [#allocation2], 4
      %s24 = int_to_ptr.vmem [resolvable:$true] %s23
      %29 = dma.hbm_to_vmem [thread:$0]  %s1, 1664, %s24, [#allocation3], 128, 128, 8
    $region9: #{text_encoder_forward.1} parent=1 // pred_fallthru
      _
    // Predicated region
    $region10: #{text_encoder_forward.1} parent=1 // pred_check
      _
    $region11: #{text_encoder_forward.1} parent=1 // pred_check_branch
      %31 = sbr.rel (0) target = $region13
    $region12: #{text_encoder_forward.1} parent=1 // pred_region
      %s33 = ssub.s32 3072, 3072
      %34 = vsyncadd [#allocation6], %s33
      %s35 = sshll.u32 [#allocation5], 4
      %s36 = int_to_ptr.vmem [resolvable:$true] %s35
      %41 = dma.hbm_to_vmem [thread:$0]  %s2, 3072, %s36, [#allocation6], 384, 384, 24
    $region13: #{text_encoder_forward.1} parent=1 // pred_fallthru
      _
    // Predicated region
    $region14: #{text_encoder_forward.1} parent=1 // pred_check
      _
    $region15: #{text_encoder_forward.1} parent=1 // pred_check_branch
      %43 = sbr.rel (0) target = $region17
    $region16: #{text_encoder_forward.1} parent=1 // pred_region
      _
    $region17: #{text_encoder_forward.1} parent=1 // pred_fallthru
      _
    // Predicated region
    $region18: #{text_encoder_forward.1} parent=1 // pred_check
      _
    $region19: #{text_encoder_forward.1} parent=1 // pred_check_branch
      %45 = sbr.rel (0) target = $region21
    $region20: #{text_encoder_forward.1} parent=1 // pred_region
      _
    $region21: #{text_encoder_forward.1} parent=1 // pred_fallthru
      _
    // Predicated region
    $region22: #{text_encoder_forward.1} parent=1 // pred_check
      _
    $region23: #{text_encoder_forward.1} parent=1 // pred_check_branch
      %47 = sbr.rel (0) target = $region25
    $region24: #{text_encoder_forward.1} parent=1 // pred_region
      _
    $region25: #{text_encoder_forward.1} parent=1 // pred_fallthru
      _
    // Predicated region
    $region26: #{text_encoder_forward.1} parent=1 // pred_check
      _
    $region27: #{text_encoder_forward.1} parent=1 // pred_check_branch
      %49 = sbr.rel (0) target = $region29
    $region28: #{text_encoder_forward.1} parent=1 // pred_region
      %50 = dma.done [#allocation3], 1664
    $region29: #{text_encoder_forward.1} parent=1 // pred_fallthru
      _
    // Predicated region
    $region30: #{text_encoder_forward.1} parent=1 // pred_check
      _
    $region31: #{text_encoder_forward.1} parent=1 // pred_check_branch
      %52 = sbr.rel (0) target = $region33
    $region32: #{text_encoder_forward.1} parent=1 // pred_region
      %53 = dma.done [#allocation6], 3072
    $region33: #{text_encoder_forward.1} parent=1 // pred_fallthru
      _
    %v54 = vld [vmem:[%s0] sm:$0xff]
    %v55 = vld [vmem:[%s0 + $0x8] sm:$0xff]
    %v56 = vld [vmem:[%s0 + $0x10] sm:$0xff]
    %v57 = vld [vmem:[%s0 + $0x18] sm:$0xff]
    %v58 = vld [vmem:[%s0 + $0x20] sm:$0xff]
    %v59 = vld [vmem:[%s0 + $0x28] sm:$0xff]
    %v60 = vld [vmem:[%s0 + $0x30] sm:$0xff]
    %v61 = vld [vmem:[%s0 + $0x38] sm:$0xff]
    %v62 = vld [vmem:[%s0 + $0x40] sm:$0xff]
    %v63 = vld [vmem:[%s0 + $0x48] sm:$0xff]
    %v64 = vlaneseq
    %v65 = vand.u32 %v64, 127
    %vm66 = vcmp.lt.s32.totalorder %v65, 50
    %v67 = vadd.s32 %v54, 50
    %v68 = vadd.s32 %v55, 50
    %v69 = vadd.s32 %v56, 50
    %v70 = vadd.s32 %v57, 50
    %v71 = vadd.s32 %v58, 50
    %v72 = vadd.s32 %v59, 50
    %v73 = vadd.s32 %v60, 50
    %v74 = vadd.s32 %v61, 50
    %v75 = vadd.s32 %v62, 50
    %v76 = vadd.s32 %v63, 50
    %77 = vset.pattern.permute.xlu0 0
    %78 = vperm.xlu0 %77, %v54
    %v79 = vpop.permute.xlu0 %78
    %80 = vset.pattern.permute.xlu0 0
    %81 = vperm.xlu0 %80, %v55
    %v82 = vpop.permute.xlu0 %81
    %83 = vset.pattern.permute.xlu0 0
    %84 = vperm.xlu0 %83, %v56
    %v85 = vpop.permute.xlu0 %84
    %86 = vset.pattern.permute.xlu0 0
    %87 = vperm.xlu0 %86, %v57
    %v88 = vpop.permute.xlu0 %87
    %89 = vset.pattern.permute.xlu0 0
    %90 = vperm.xlu0 %89, %v58
    %v91 = vpop.permute.xlu0 %90
    %92 = vset.pattern.permute.xlu0 0
    %93 = vperm.xlu0 %92, %v59
    %v94 = vpop.permute.xlu0 %93
    %95 = vset.pattern.permute.xlu0 0
    %96 = vperm.xlu0 %95, %v60
    %v97 = vpop.permute.xlu0 %96
    %98 = vset.pattern.permute.xlu0 0
    %99 = vperm.xlu0 %98, %v61
    %v100 = vpop.permute.xlu0 %99
    %101 = vset.pattern.permute.xlu0 0
    %102 = vperm.xlu0 %101, %v62
    %v103 = vpop.permute.xlu0 %102
    %104 = vset.pattern.permute.xlu0 0
    %105 = vperm.xlu0 %104, %v63
    %v106 = vpop.permute.xlu0 %105
    %107 = vset.pattern.permute.xlu0 1
    %108 = vperm.xlu0 %107, %v67
    %v109 = vpop.permute.xlu0 %108
    %110 = vset.pattern.permute.xlu0 1
    %111 = vperm.xlu0 %110, %v68
    %v112 = vpop.permute.xlu0 %111
    %113 = vset.pattern.permute.xlu0 1
    %114 = vperm.xlu0 %113, %v69
    %v115 = vpop.permute.xlu0 %114
    %116 = vset.pattern.permute.xlu0 1
    %117 = vperm.xlu0 %116, %v70
    %v118 = vpop.permute.xlu0 %117
    %119 = vset.pattern.permute.xlu0 1
    %120 = vperm.xlu0 %119, %v71
    %v121 = vpop.permute.xlu0 %120
    %122 = vset.pattern.permute.xlu0 1
    %123 = vperm.xlu0 %122, %v72
    %v124 = vpop.permute.xlu0 %123
    %125 = vset.pattern.permute.xlu0 1
    %126 = vperm.xlu0 %125, %v73
    %v127 = vpop.permute.xlu0 %126
    %128 = vset.pattern.permute.xlu0 1
    %129 = vperm.xlu0 %128, %v74
    %v130 = vpop.permute.xlu0 %129
    %131 = vset.pattern.permute.xlu0 1
    %132 = vperm.xlu0 %131, %v75
    %v133 = vpop.permute.xlu0 %132
    %134 = vset.pattern.permute.xlu0 1
    %135 = vperm.xlu0 %134, %v76
    %v136 = vpop.permute.xlu0 %135
    %v137 = vsel %vm66, %v79, %v109
    %v138 = vsel %vm66, %v82, %v112
    %v139 = vsel %vm66, %v85, %v115
    %v140 = vsel %vm66, %v88, %v118
    %v141 = vsel %vm66, %v91, %v121
    %v142 = vsel %vm66, %v94, %v124
    %v143 = vsel %vm66, %v97, %v127
    %v144 = vsel %vm66, %v100, %v130
    %v145 = vsel %vm66, %v103, %v133
    %v146 = vsel %vm66, %v106, %v136
    %vm147 = vcmp.eq.s32.totalorder %v65, %v137
    %vm148 = vcmp.eq.s32.totalorder %v65, %v138
    %vm149 = vcmp.eq.s32.totalorder %v65, %v139
    %vm150 = vcmp.eq.s32.totalorder %v65, %v140
    %vm151 = vcmp.eq.s32.totalorder %v65, %v141
    %vm152 = vcmp.eq.s32.totalorder %v65, %v142
    %vm153 = vcmp.eq.s32.totalorder %v65, %v143
    %vm154 = vcmp.eq.s32.totalorder %v65, %v144
    %vm155 = vcmp.eq.s32.totalorder %v65, %v145
    %vm156 = vcmp.eq.s32.totalorder %v65, %v146
    %v157 = vsel %vm147, 1.0, 0.0
    %v158 = vsel %vm148, 1.0, 0.0
    %v159 = vsel %vm149, 1.0, 0.0
    %v160 = vsel %vm150, 1.0, 0.0
    %v161 = vsel %vm151, 1.0, 0.0
    %v162 = vsel %vm152, 1.0, 0.0
    %v163 = vsel %vm153, 1.0, 0.0
    %v164 = vsel %vm154, 1.0, 0.0
    %v165 = vsel %vm155, 1.0, 0.0
    %v166 = vsel %vm156, 1.0, 0.0
    %v167 = vld [vmem:[#allocation2] sm:$0xff]
    %v168 = vld [vmem:[#allocation2 + $0x8] sm:$0xff]
    %v169 = vld [vmem:[#allocation2 + $0x10] sm:$0xff]
    %v170 = vld [vmem:[#allocation2 + $0x18] sm:$0xff]
    %v171 = vld [vmem:[#allocation2 + $0x20] sm:$0xff]
    %v172 = vld [vmem:[#allocation2 + $0x28] sm:$0xff]
    %v173 = vld [vmem:[#allocation2 + $0x30] sm:$0xff]
    %v174 = vld [vmem:[#allocation2 + $0x38] sm:$0xff]
    %v175 = vld [vmem:[#allocation2 + $0x40] sm:$0xff]
    %v176 = vld [vmem:[#allocation2 + $0x48] sm:$0xff]
    %v177 = vld [vmem:[#allocation2 + $0x50] sm:$0xff]
    %v178 = vld [vmem:[#allocation2 + $0x58] sm:$0xff]
    %v179 = vld [vmem:[#allocation2 + $0x60] sm:$0xf]
    %vm180 = vcmask 818176
    %v182 = vsel %vm180, %v157, 0
    %v185 = vsel %vm180, %v158, 0
    %v188 = vsel %vm180, %v159, 0
    %v191 = vsel %vm180, %v160, 0
    %v194 = vsel %vm180, %v161, 0
    %v197 = vsel %vm180, %v162, 0
    %v200 = vsel %vm180, %v163, 0
    %v203 = vsel %vm180, %v164, 0
    %v206 = vsel %vm180, %v165, 0
    %v209 = vsel %vm180, %v166, 0
    %vm211 = vcmask 1043456
    %v213 = vsel %vm211, %v179, 0
    %215 = vmatprep.subr.mxu0 0.0
    %216 = vmatpush1.msra.mxu0 %v167
    %217 = vmatprep.subr.mxu0 0.0
    %218 = vmatpush1.msra.mxu0 %v168
    %219 = vmatprep.subr.mxu0 0.0
    %220 = vmatpush1.msra.mxu0 %v169
    %221 = vmatprep.subr.mxu0 0.0
    %222 = vmatpush1.msra.mxu0 %v170
    %223 = vmatprep.subr.mxu0 0.0
    %224 = vmatpush1.msra.mxu0 %v171
    %225 = vmatprep.subr.mxu0 0.0
    %226 = vmatpush1.msra.mxu0 %v172
    %227 = vmatprep.subr.mxu0 0.0
    %228 = vmatpush1.msra.mxu0 %v173
    %229 = vmatprep.subr.mxu0 0.0
    %230 = vmatpush1.msra.mxu0 %v174
    %231 = vmatprep.subr.mxu0 0.0
    %232 = vmatpush1.msra.mxu0 %v175
    %233 = vmatprep.subr.mxu0 0.0
    %234 = vmatpush1.msra.mxu0 %v176
    %235 = vmatprep.subr.mxu0 0.0
    %236 = vmatpush1.msra.mxu0 %v177
    %237 = vmatprep.subr.mxu0 0.0
    %238 = vmatpush1.msra.mxu0 %v178
    %239 = vmatprep.subr.mxu0 0.0
    %240 = vmatpush1.msra.mxu0 %v213
    %241 = vmatprep.subr.mxu0 0.0
    %242 = vmatpush1.msra.mxu0 0.0
    %243 = vmatprep.subr.mxu0 0.0
    %244 = vmatpush1.msra.mxu0 0.0
    %245 = vmatprep.subr.mxu0 0.0
    %246 = vmatpush1.msra.mxu0 0.0
    %247 = vmatprep.subr.mxu0 0.0
    %248 = vmatpush1.msra.mxu0 0.0
    %249 = vmatprep.subr.mxu0 0.0
    %250 = vmatpush1.msra.mxu0 0.0
    %251 = vmatprep.subr.mxu0 0.0
    %252 = vmatpush1.msra.mxu0 0.0
    %253 = vmatprep.subr.mxu0 0.0
    %254 = vmatpush1.msra.mxu0 0.0
    %255 = vmatprep.subr.mxu0 0.0
    %256 = vmatpush1.msra.mxu0 0.0
    %257 = vmatprep.subr.mxu0 0.0
    %258 = vmatpush1.msra.mxu0 0.0
    %259 = vmatprep.subr.mxu0 0.0
    %260 = vmatpush1.msra.mxu0 0.0
    %261 = vmatprep.subr.mxu0 0.0
    %262 = vmatpush1.msra.mxu0 0.0
    %263 = vmatprep.subr.mxu0 0.0
    %264 = vmatpush1.msra.mxu0 0.0
    %265 = vmatprep.subr.mxu0 0.0
    %266 = vmatpush1.msra.mxu0 0.0
    %267 = vmatprep.subr.mxu0 0.0
    %268 = vmatpush1.msra.mxu0 0.0
    %269 = vmatprep.subr.mxu0 0.0
    %270 = vmatpush1.msra.mxu0 0.0
    %271 = vmatprep.subr.mxu0 0.0
    %272 = vmatpush1.msra.mxu0 0.0
    %273 = vmatprep.subr.mxu0 0.0
    %274 = vmatpush1.msra.mxu0 0.0
    %275 = vmatprep.subr.mxu0 0.0
    %276 = vmatpush1.msra.mxu0 0.0
    %277 = vmatprep.subr.mxu0 0.0
    %278 = vmatpush1.msra.mxu0 0.0
    %279 = vmatprep.mubr.f32.mxu0 0.0
    %280 = vmatmul.mubr.f32.gmra.mrb[0].mxu0 %v182
    %v281 = vpop.f32.mrb[0].mxu0
    %v282 = vadd.f32 0.0, %v281
    %v283 = vpop.f32.mrb[0].mxu0
    %284 = vmatprep.mubr.f32.mxu0 0.0
    %285 = vmatmul.mubr.f32.gmra.mrb[0].mxu0 %v185
    %v286 = vpop.f32.mrb[0].mxu0
    %v287 = vadd.f32 0.0, %v286
    %v288 = vpop.f32.mrb[0].mxu0
    %289 = vmatprep.mubr.f32.mxu0 0.0
    %290 = vmatmul.mubr.f32.gmra.mrb[0].mxu0 %v188
    %v291 = vpop.f32.mrb[0].mxu0
    %v292 = vadd.f32 0.0, %v291
    %v293 = vpop.f32.mrb[0].mxu0
    %294 = vmatprep.mubr.f32.mxu0 0.0
    %295 = vmatmul.mubr.f32.gmra.mrb[0].mxu0 %v191
    %v296 = vpop.f32.mrb[0].mxu0
    %v297 = vadd.f32 0.0, %v296
    %v298 = vpop.f32.mrb[0].mxu0
    %299 = vmatprep.mubr.f32.mxu0 0.0
    %300 = vmatmul.mubr.f32.gmra.mrb[0].mxu0 %v194
    %v301 = vpop.f32.mrb[0].mxu0
    %v302 = vadd.f32 0.0, %v301
    %v303 = vpop.f32.mrb[0].mxu0
    %304 = vmatprep.mubr.f32.mxu0 0.0
    %305 = vmatmul.mubr.f32.gmra.mrb[0].mxu0 %v197
    %v306 = vpop.f32.mrb[0].mxu0
    %v307 = vadd.f32 0.0, %v306
    %v308 = vpop.f32.mrb[0].mxu0
    %309 = vmatprep.mubr.f32.mxu0 0.0
    %310 = vmatmul.mubr.f32.gmra.mrb[0].mxu0 %v200
    %v311 = vpop.f32.mrb[0].mxu0
    %v312 = vadd.f32 0.0, %v311
    %v313 = vpop.f32.mrb[0].mxu0
    %314 = vmatprep.mubr.f32.mxu0 0.0
    %315 = vmatmul.mubr.f32.gmra.mrb[0].mxu0 %v203
    %v316 = vpop.f32.mrb[0].mxu0
    %v317 = vadd.f32 0.0, %v316
    %v318 = vpop.f32.mrb[0].mxu0
    %319 = vmatprep.mubr.f32.mxu0 0.0
    %320 = vmatmul.mubr.f32.gmra.mrb[0].mxu0 %v206
    %v321 = vpop.f32.mrb[0].mxu0
    %v322 = vadd.f32 0.0, %v321
    %v323 = vpop.f32.mrb[0].mxu0
    %324 = vmatprep.mubr.f32.mxu0 0.0
    %325 = vmatmul.mubr.f32.gmra.mrb[0].mxu0 %v209
    %v326 = vpop.f32.mrb[0].mxu0
    %v327 = vadd.f32 0.0, %v326
    %v328 = vpop.f32.mrb[0].mxu0
    %329 = vdwg.mxu0
    %v330 = vld [vmem:[#allocation5] sm:$0xff]
    %v331 = vld [vmem:[#allocation5 + $0x8] sm:$0xff]
    %v332 = vld [vmem:[#allocation5 + $0x10] sm:$0xff]
    %v333 = vld [vmem:[#allocation5 + $0x18] sm:$0xff]
    %v334 = vld [vmem:[#allocation5 + $0x20] sm:$0xff]
    %v335 = vld [vmem:[#allocation5 + $0x28] sm:$0xff]
    %v336 = vld [vmem:[#allocation5 + $0x30] sm:$0xff]
    %v337 = vld [vmem:[#allocation5 + $0x38] sm:$0xff]
    %v338 = vld [vmem:[#allocation5 + $0x40] sm:$0xff]
    %v339 = vld [vmem:[#allocation5 + $0x48] sm:$0xff]
    %v340 = vld [vmem:[#allocation5 + $0x50] sm:$0xff]
    %v341 = vld [vmem:[#allocation5 + $0x58] sm:$0xff]
    %v342 = vld [vmem:[#allocation5 + $0x60] sm:$0xff]
    %v343 = vld [vmem:[#allocation5 + $0x68] sm:$0xff]
    %v344 = vld [vmem:[#allocation5 + $0x70] sm:$0xff]
    %v345 = vld [vmem:[#allocation5 + $0x78] sm:$0xff]
    %v346 = vld [vmem:[#allocation5 + $0x80] sm:$0xff]
    %v347 = vld [vmem:[#allocation5 + $0x88] sm:$0xff]
    %v348 = vld [vmem:[#allocation5 + $0x90] sm:$0xff]
    %v349 = vld [vmem:[#allocation5 + $0x98] sm:$0xff]
    %v350 = vld [vmem:[#allocation5 + $0xa0] sm:$0xff]
    %v351 = vld [vmem:[#allocation5 + $0xa8] sm:$0xff]
    %v352 = vld [vmem:[#allocation5 + $0xb0] sm:$0xff]
    %v353 = vld [vmem:[#allocation5 + $0xb8] sm:$0xff]
    %v354 = vld [vmem:[%s3] sm:$0x7]
    %v356 = vlaneseq
    %v357 = vshrl.u32 %v356, 7
    %v358 = vsub.s32 0, %v357
    %v359 = vrot.slane %v354, %v358
    %v360 = vlaneseq
    %v361 = vshrl.u32 %v360, 7
    %v362 = vsub.s32 1, %v361
    %v363 = vrot.slane %v354, %v362
    %v364 = vlaneseq
    %v365 = vshrl.u32 %v364, 7
    %v366 = vsub.s32 2, %v365
    %v367 = vrot.slane %v354, %v366
    %vm371 = vcmask 523264
    %v373 = vsel %vm371, %v282, 0
    %v376 = vsel %vm371, %v287, 0
    %v379 = vsel %vm371, %v292, 0
    %v382 = vsel %vm371, %v297, 0
    %v385 = vsel %vm371, %v302, 0
    %v388 = vsel %vm371, %v307, 0
    %v391 = vsel %vm371, %v312, 0
    %v394 = vsel %vm371, %v317, 0
    %v397 = vsel %vm371, %v322, 0
    %v400 = vsel %vm371, %v327, 0
    %402 = vmatprep.subr.mxu0 %v331
    %403 = vmatpush1.msra.mxu0 %v330
    %404 = vmatprep.subr.mxu0 %v334
    %405 = vmatpush1.msra.mxu0 %v333
    %406 = vmatprep.subr.mxu0 %v337
    %407 = vmatpush1.msra.mxu0 %v336
    %408 = vmatprep.subr.mxu0 %v340
    %409 = vmatpush1.msra.mxu0 %v339
    %410 = vmatprep.subr.mxu0 %v343
    %411 = vmatpush1.msra.mxu0 %v342
    %412 = vmatprep.subr.mxu0 %v346
    %413 = vmatpush1.msra.mxu0 %v345
    %414 = vmatprep.subr.mxu0 %v349
    %415 = vmatpush1.msra.mxu0 %v348
    %416 = vmatprep.subr.mxu0 %v352
    %417 = vmatpush1.msra.mxu0 %v351
    %418 = vmatprep.subr.mxu0 0.0
    %419 = vmatpush1.msra.mxu0 0.0
    %420 = vmatprep.subr.mxu0 0.0
    %421 = vmatpush1.msra.mxu0 0.0
    %422 = vmatprep.subr.mxu0 0.0
    %423 = vmatpush1.msra.mxu0 0.0
    %424 = vmatprep.subr.mxu0 0.0
    %425 = vmatpush1.msra.mxu0 0.0
    %426 = vmatprep.subr.mxu0 0.0
    %427 = vmatpush1.msra.mxu0 0.0
    %428 = vmatprep.subr.mxu0 0.0
    %429 = vmatpush1.msra.mxu0 0.0
    %430 = vmatprep.subr.mxu0 0.0
    %431 = vmatpush1.msra.mxu0 0.0
    %432 = vmatprep.subr.mxu0 0.0
    %433 = vmatpush1.msra.mxu0 0.0
    %434 = vmatprep.subr.mxu0 0.0
    %435 = vmatpush1.msra.mxu0 0.0
    %436 = vmatprep.subr.mxu0 0.0
    %437 = vmatpush1.msra.mxu0 0.0
    %438 = vmatprep.subr.mxu0 0.0
    %439 = vmatpush1.msra.mxu0 0.0
    %440 = vmatprep.subr.mxu0 0.0
    %441 = vmatpush1.msra.mxu0 0.0
    %442 = vmatprep.subr.mxu0 0.0
    %443 = vmatpush1.msra.mxu0 0.0
    %444 = vmatprep.subr.mxu0 0.0
    %445 = vmatpush1.msra.mxu0 0.0
    %446 = vmatprep.subr.mxu0 0.0
    %447 = vmatpush1.msra.mxu0 0.0
    %448 = vmatprep.subr.mxu0 0.0
    %449 = vmatpush1.msra.mxu0 0.0
    %450 = vmatprep.subr.mxu0 0.0
    %451 = vmatpush1.msra.mxu0 0.0
    %452 = vmatprep.subr.mxu0 0.0
    %453 = vmatpush1.msra.mxu0 0.0
    %454 = vmatprep.subr.mxu0 0.0
    %455 = vmatpush1.msra.mxu0 0.0
    %456 = vmatprep.subr.mxu0 0.0
    %457 = vmatpush1.msra.mxu0 0.0
    %458 = vmatprep.subr.mxu0 0.0
    %459 = vmatpush1.msra.mxu0 0.0
    %460 = vmatprep.subr.mxu0 0.0
    %461 = vmatpush1.msra.mxu0 0.0
    %462 = vmatprep.subr.mxu0 0.0
    %463 = vmatpush1.msra.mxu0 0.0
    %464 = vmatprep.subr.mxu0 0.0
    %465 = vmatpush1.msra.mxu0 0.0
    %466 = vmatprep.mubr.f32.mxu0 0.0
    %467 = vmatmul.mubr.f32.gmra.mrb[0].mxu0 %v373
    %v468 = vpop.f32.mrb[0].mxu0
    %v469 = vadd.f32 %v359, %v468
    %v470 = vpop.f32.mrb[0].mxu0
    %v471 = vadd.f32 %v363, %v470
    %472 = vmatprep.mubr.f32.mxu0 0.0
    %473 = vmatmul.mubr.f32.gmra.mrb[0].mxu0 %v376
    %v474 = vpop.f32.mrb[0].mxu0
    %v475 = vadd.f32 %v359, %v474
    %v476 = vpop.f32.mrb[0].mxu0
    %v477 = vadd.f32 %v363, %v476
    %478 = vmatprep.mubr.f32.mxu0 0.0
    %479 = vmatmul.mubr.f32.gmra.mrb[0].mxu0 %v379
    %v480 = vpop.f32.mrb[0].mxu0
    %v481 = vadd.f32 %v359, %v480
    %v482 = vpop.f32.mrb[0].mxu0
    %v483 = vadd.f32 %v363, %v482
    %484 = vmatprep.mubr.f32.mxu0 0.0
    %485 = vmatmul.mubr.f32.gmra.mrb[0].mxu0 %v382
    %v486 = vpop.f32.mrb[0].mxu0
    %v487 = vadd.f32 %v359, %v486
    %v488 = vpop.f32.mrb[0].mxu0
    %v489 = vadd.f32 %v363, %v488
    %490 = vmatprep.mubr.f32.mxu0 0.0
    %491 = vmatmul.mubr.f32.gmra.mrb[0].mxu0 %v385
    %v492 = vpop.f32.mrb[0].mxu0
    %v493 = vadd.f32 %v359, %v492
    %v494 = vpop.f32.mrb[0].mxu0
    %v495 = vadd.f32 %v363, %v494
    %496 = vmatprep.mubr.f32.mxu0 0.0
    %497 = vmatmul.mubr.f32.gmra.mrb[0].mxu0 %v388
    %v498 = vpop.f32.mrb[0].mxu0
    %v499 = vadd.f32 %v359, %v498
    %v500 = vpop.f32.mrb[0].mxu0
    %v501 = vadd.f32 %v363, %v500
    %502 = vmatprep.mubr.f32.mxu0 0.0
    %503 = vmatmul.mubr.f32.gmra.mrb[0].mxu0 %v391
    %v504 = vpop.f32.mrb[0].mxu0
    %v505 = vadd.f32 %v359, %v504
    %v506 = vpop.f32.mrb[0].mxu0
    %v507 = vadd.f32 %v363, %v506
    %508 = vmatprep.mubr.f32.mxu0 0.0
    %509 = vmatmul.mubr.f32.gmra.mrb[0].mxu0 %v394
    %v510 = vpop.f32.mrb[0].mxu0
    %v511 = vadd.f32 %v359, %v510
    %v512 = vpop.f32.mrb[0].mxu0
    %v513 = vadd.f32 %v363, %v512
    %514 = vmatprep.mubr.f32.mxu0 0.0
    %515 = vmatmul.mubr.f32.gmra.mrb[0].mxu0 %v397
    %v516 = vpop.f32.mrb[0].mxu0
    %v517 = vadd.f32 %v359, %v516
    %v518 = vpop.f32.mrb[0].mxu0
    %v519 = vadd.f32 %v363, %v518
    %520 = vmatprep.mubr.f32.mxu0 0.0
    %521 = vmatmul.mubr.f32.gmra.mrb[0].mxu0 %v400
    %v522 = vpop.f32.mrb[0].mxu0
    %v523 = vadd.f32 %v359, %v522
    %v524 = vpop.f32.mrb[0].mxu0
    %v525 = vadd.f32 %v363, %v524
    %526 = vdwg.mxu0
    %527 = vmatprep.subr.mxu0 0.0
    %528 = vmatpush1.msra.mxu0 %v332
    %529 = vmatprep.subr.mxu0 0.0
    %530 = vmatpush1.msra.mxu0 %v335
    %531 = vmatprep.subr.mxu0 0.0
    %532 = vmatpush1.msra.mxu0 %v338
    %533 = vmatprep.subr.mxu0 0.0
    %534 = vmatpush1.msra.mxu0 %v341
    %535 = vmatprep.subr.mxu0 0.0
    %536 = vmatpush1.msra.mxu0 %v344
    %537 = vmatprep.subr.mxu0 0.0
    %538 = vmatpush1.msra.mxu0 %v347
    %539 = vmatprep.subr.mxu0 0.0
    %540 = vmatpush1.msra.mxu0 %v350
    %541 = vmatprep.subr.mxu0 0.0
    %542 = vmatpush1.msra.mxu0 %v353
    %543 = vmatprep.subr.mxu0 0.0
    %544 = vmatpush1.msra.mxu0 0.0
    %545 = vmatprep.subr.mxu0 0.0
    %546 = vmatpush1.msra.mxu0 0.0
    %547 = vmatprep.subr.mxu0 0.0
    %548 = vmatpush1.msra.mxu0 0.0
    %549 = vmatprep.subr.mxu0 0.0
    %550 = vmatpush1.msra.mxu0 0.0
    %551 = vmatprep.subr.mxu0 0.0
    %552 = vmatpush1.msra.mxu0 0.0
    %553 = vmatprep.subr.mxu0 0.0
    %554 = vmatpush1.msra.mxu0 0.0
    %555 = vmatprep.subr.mxu0 0.0
    %556 = vmatpush1.msra.mxu0 0.0
    %557 = vmatprep.subr.mxu0 0.0
    %558 = vmatpush1.msra.mxu0 0.0
    %559 = vmatprep.subr.mxu0 0.0
    %560 = vmatpush1.msra.mxu0 0.0
    %561 = vmatprep.subr.mxu0 0.0
    %562 = vmatpush1.msra.mxu0 0.0
    %563 = vmatprep.subr.mxu0 0.0
    %564 = vmatpush1.msra.mxu0 0.0
    %565 = vmatprep.subr.mxu0 0.0
    %566 = vmatpush1.msra.mxu0 0.0
    %567 = vmatprep.subr.mxu0 0.0
    %568 = vmatpush1.msra.mxu0 0.0
    %569 = vmatprep.subr.mxu0 0.0
    %570 = vmatpush1.msra.mxu0 0.0
    %571 = vmatprep.subr.mxu0 0.0
    %572 = vmatpush1.msra.mxu0 0.0
    %573 = vmatprep.subr.mxu0 0.0
    %574 = vmatpush1.msra.mxu0 0.0
    %575 = vmatprep.subr.mxu0 0.0
    %576 = vmatpush1.msra.mxu0 0.0
    %577 = vmatprep.subr.mxu0 0.0
    %578 = vmatpush1.msra.mxu0 0.0
    %579 = vmatprep.subr.mxu0 0.0
    %580 = vmatpush1.msra.mxu0 0.0
    %581 = vmatprep.subr.mxu0 0.0
    %582 = vmatpush1.msra.mxu0 0.0
    %583 = vmatprep.subr.mxu0 0.0
    %584 = vmatpush1.msra.mxu0 0.0
    %585 = vmatprep.subr.mxu0 0.0
    %586 = vmatpush1.msra.mxu0 0.0
    %587 = vmatprep.subr.mxu0 0.0
    %588 = vmatpush1.msra.mxu0 0.0
    %589 = vmatprep.subr.mxu0 0.0
    %590 = vmatpush1.msra.mxu0 0.0
    %591 = vmatprep.mubr.f32.mxu0 0.0
    %592 = vmatmul.mubr.f32.gmra.mrb[0].mxu0 %v373
    %v593 = vpop.f32.mrb[0].mxu0
    %v594 = vadd.f32 %v367, %v593
    %v595 = vpop.f32.mrb[0].mxu0
    %596 = vmatprep.mubr.f32.mxu0 0.0
    %597 = vmatmul.mubr.f32.gmra.mrb[0].mxu0 %v376
    %v598 = vpop.f32.mrb[0].mxu0
    %v599 = vadd.f32 %v367, %v598
    %v600 = vpop.f32.mrb[0].mxu0
    %601 = vmatprep.mubr.f32.mxu0 0.0
    %602 = vmatmul.mubr.f32.gmra.mrb[0].mxu0 %v379
    %v603 = vpop.f32.mrb[0].mxu0
    %v604 = vadd.f32 %v367, %v603
    %v605 = vpop.f32.mrb[0].mxu0
    %606 = vmatprep.mubr.f32.mxu0 0.0
    %607 = vmatmul.mubr.f32.gmra.mrb[0].mxu0 %v382
    %v608 = vpop.f32.mrb[0].mxu0
    %v609 = vadd.f32 %v367, %v608
    %v610 = vpop.f32.mrb[0].mxu0
    %611 = vmatprep.mubr.f32.mxu0 0.0
    %612 = vmatmul.mubr.f32.gmra.mrb[0].mxu0 %v385
    %v613 = vpop.f32.mrb[0].mxu0
    %v614 = vadd.f32 %v367, %v613
    %v615 = vpop.f32.mrb[0].mxu0
    %616 = vmatprep.mubr.f32.mxu0 0.0
    %617 = vmatmul.mubr.f32.gmra.mrb[0].mxu0 %v388
    %v618 = vpop.f32.mrb[0].mxu0
    %v619 = vadd.f32 %v367, %v618
    %v620 = vpop.f32.mrb[0].mxu0
    %621 = vmatprep.mubr.f32.mxu0 0.0
    %622 = vmatmul.mubr.f32.gmra.mrb[0].mxu0 %v391
    %v623 = vpop.f32.mrb[0].mxu0
    %v624 = vadd.f32 %v367, %v623
    %v625 = vpop.f32.mrb[0].mxu0
    %626 = vmatprep.mubr.f32.mxu0 0.0
    %627 = vmatmul.mubr.f32.gmra.mrb[0].mxu0 %v394
    %v628 = vpop.f32.mrb[0].mxu0
    %v629 = vadd.f32 %v367, %v628
    %v630 = vpop.f32.mrb[0].mxu0
    %631 = vmatprep.mubr.f32.mxu0 0.0
    %632 = vmatmul.mubr.f32.gmra.mrb[0].mxu0 %v397
    %v633 = vpop.f32.mrb[0].mxu0
    %v634 = vadd.f32 %v367, %v633
    %v635 = vpop.f32.mrb[0].mxu0
    %636 = vmatprep.mubr.f32.mxu0 0.0
    %637 = vmatmul.mubr.f32.gmra.mrb[0].mxu0 %v400
    %v638 = vpop.f32.mrb[0].mxu0
    %v639 = vadd.f32 %v367, %v638
    %v640 = vpop.f32.mrb[0].mxu0
    %641 = vdwg.mxu0
    %v642 = vld [vmem:[%s4] sm:$0xff]
    %v643 = vld [vmem:[%s4 + $0x8] sm:$0xff]
    %v644 = vld [vmem:[%s4 + $0x10] sm:$0xff]
    %v645 = vld [vmem:[%s4 + $0x18] sm:$0xff]
    %v646 = vld [vmem:[%s4 + $0x20] sm:$0xff]
    %v647 = vld [vmem:[%s4 + $0x28] sm:$0xff]
    %v648 = vld [vmem:[%s4 + $0x30] sm:$0xff]
    %v649 = vld [vmem:[%s4 + $0x38] sm:$0xff]
    %v650 = vld [vmem:[%s4 + $0x40] sm:$0xff]
    %v651 = vld [vmem:[%s4 + $0x48] sm:$0xff]
    %v652 = vld [vmem:[%s4 + $0x50] sm:$0xff]
    %v653 = vld [vmem:[%s4 + $0x58] sm:$0xff]
    %v654 = vld [vmem:[%s4 + $0x60] sm:$0xff]
    %v655 = vld [vmem:[%s4 + $0x68] sm:$0xff]
    %v656 = vld [vmem:[%s4 + $0x70] sm:$0xff]
    %v657 = vld [vmem:[%s4 + $0x78] sm:$0xff]
    %v658 = vld [vmem:[%s4 + $0x80] sm:$0xff]
    %v659 = vld [vmem:[%s4 + $0x88] sm:$0xff]
    %v660 = vld [vmem:[%s4 + $0x90] sm:$0xff]
    %v661 = vld [vmem:[%s4 + $0x98] sm:$0xff]
    %v662 = vld [vmem:[%s4 + $0xa0] sm:$0xff]
    %v663 = vld [vmem:[%s4 + $0xa8] sm:$0xff]
    %v664 = vld [vmem:[%s4 + $0xb0] sm:$0xff]
    %v665 = vld [vmem:[%s4 + $0xb8] sm:$0xff]
    %v666 = vld [vmem:[%s5] sm:$0x1]
    %v668 = vlaneseq
    %v669 = vshrl.u32 %v668, 7
    %v670 = vsub.s32 0, %v669
    %v671 = vrot.slane %v666, %v670
    %v674 = vsel %vm371, 0.0, 0
    %676 = vmatprep.subr.mxu0 %v643
    %677 = vmatpush1.msra.mxu0 %v642
    %678 = vmatprep.subr.mxu0 %v646
    %679 = vmatpush1.msra.mxu0 %v645
    %680 = vmatprep.subr.mxu0 %v649
    %681 = vmatpush1.msra.mxu0 %v648
    %682 = vmatprep.subr.mxu0 %v652
    %683 = vmatpush1.msra.mxu0 %v651
    %684 = vmatprep.subr.mxu0 %v655
    %685 = vmatpush1.msra.mxu0 %v654
    %686 = vmatprep.subr.mxu0 %v658
    %687 = vmatpush1.msra.mxu0 %v657
    %688 = vmatprep.subr.mxu0 %v661
    %689 = vmatpush1.msra.mxu0 %v660
    %690 = vmatprep.subr.mxu0 %v664
    %691 = vmatpush1.msra.mxu0 %v663
    %692 = vmatprep.subr.mxu0 0.0
    %693 = vmatpush1.msra.mxu0 0.0
    %694 = vmatprep.subr.mxu0 0.0
    %695 = vmatpush1.msra.mxu0 0.0
    %696 = vmatprep.subr.mxu0 0.0
    %697 = vmatpush1.msra.mxu0 0.0
    %698 = vmatprep.subr.mxu0 0.0
    %699 = vmatpush1.msra.mxu0 0.0
    %700 = vmatprep.subr.mxu0 0.0
    %701 = vmatpush1.msra.mxu0 0.0
    %702 = vmatprep.subr.mxu0 0.0
    %703 = vmatpush1.msra.mxu0 0.0
    %704 = vmatprep.subr.mxu0 0.0
    %705 = vmatpush1.msra.mxu0 0.0
    %706 = vmatprep.subr.mxu0 0.0
    %707 = vmatpush1.msra.mxu0 0.0
    %708 = vmatprep.subr.mxu0 0.0
    %709 = vmatpush1.msra.mxu0 0.0
    %710 = vmatprep.subr.mxu0 0.0
    %711 = vmatpush1.msra.mxu0 0.0
    %712 = vmatprep.subr.mxu0 0.0
    %713 = vmatpush1.msra.mxu0 0.0
    %714 = vmatprep.subr.mxu0 0.0
    %715 = vmatpush1.msra.mxu0 0.0
    %716 = vmatprep.subr.mxu0 0.0
    %717 = vmatpush1.msra.mxu0 0.0
    %718 = vmatprep.subr.mxu0 0.0
    %719 = vmatpush1.msra.mxu0 0.0
    %720 = vmatprep.subr.mxu0 0.0
    %721 = vmatpush1.msra.mxu0 0.0
    %722 = vmatprep.subr.mxu0 0.0
    %723 = vmatpush1.msra.mxu0 0.0
    %724 = vmatprep.subr.mxu0 0.0
    %725 = vmatpush1.msra.mxu0 0.0
    %726 = vmatprep.subr.mxu0 0.0
    %727 = vmatpush1.msra.mxu0 0.0
    %728 = vmatprep.subr.mxu0 0.0
    %729 = vmatpush1.msra.mxu0 0.0
    %730 = vmatprep.subr.mxu0 0.0
    %731 = vmatpush1.msra.mxu0 0.0
    %732 = vmatprep.subr.mxu0 0.0
    %733 = vmatpush1.msra.mxu0 0.0
    %734 = vmatprep.subr.mxu0 0.0
    %735 = vmatpush1.msra.mxu0 0.0
    %736 = vmatprep.subr.mxu0 0.0
    %737 = vmatpush1.msra.mxu0 0.0
    %738 = vmatprep.subr.mxu0 0.0
    %739 = vmatpush1.msra.mxu0 0.0
    %740 = vmatprep.mubr.f32.mxu0 0.0
    %741 = vmatmul.mubr.f32.gmra.mrb[0].mxu0 %v674
    %v742 = vpop.f32.mrb[0].mxu0
    %v743 = vadd.f32 0.0, %v742
    %v744 = vpop.f32.mrb[0].mxu0
    %v745 = vadd.f32 0.0, %v744
    %746 = vdwg.mxu0
    %747 = vmatprep.subr.mxu0 0.0
    %748 = vmatpush1.msra.mxu0 %v644
    %749 = vmatprep.subr.mxu0 0.0
    %750 = vmatpush1.msra.mxu0 %v647
    %751 = vmatprep.subr.mxu0 0.0
    %752 = vmatpush1.msra.mxu0 %v650
    %753 = vmatprep.subr.mxu0 0.0
    %754 = vmatpush1.msra.mxu0 %v653
    %755 = vmatprep.subr.mxu0 0.0
    %756 = vmatpush1.msra.mxu0 %v656
    %757 = vmatprep.subr.mxu0 0.0
    %758 = vmatpush1.msra.mxu0 %v659
    %759 = vmatprep.subr.mxu0 0.0
    %760 = vmatpush1.msra.mxu0 %v662
    %761 = vmatprep.subr.mxu0 0.0
    %762 = vmatpush1.msra.mxu0 %v665
    %763 = vmatprep.subr.mxu0 0.0
    %764 = vmatpush1.msra.mxu0 0.0
    %765 = vmatprep.subr.mxu0 0.0
    %766 = vmatpush1.msra.mxu0 0.0
    %767 = vmatprep.subr.mxu0 0.0
    %768 = vmatpush1.msra.mxu0 0.0
    %769 = vmatprep.subr.mxu0 0.0
    %770 = vmatpush1.msra.mxu0 0.0
    %771 = vmatprep.subr.mxu0 0.0
    %772 = vmatpush1.msra.mxu0 0.0
    %773 = vmatprep.subr.mxu0 0.0
    %774 = vmatpush1.msra.mxu0 0.0
    %775 = vmatprep.subr.mxu0 0.0
    %776 = vmatpush1.msra.mxu0 0.0
    %777 = vmatprep.subr.mxu0 0.0
    %778 = vmatpush1.msra.mxu0 0.0
    %779 = vmatprep.subr.mxu0 0.0
    %780 = vmatpush1.msra.mxu0 0.0
    %781 = vmatprep.subr.mxu0 0.0
    %782 = vmatpush1.msra.mxu0 0.0
    %783 = vmatprep.subr.mxu0 0.0
    %784 = vmatpush1.msra.mxu0 0.0
    %785 = vmatprep.subr.mxu0 0.0
    %786 = vmatpush1.msra.mxu0 0.0
    %787 = vmatprep.subr.mxu0 0.0
    %788 = vmatpush1.msra.mxu0 0.0
    %789 = vmatprep.subr.mxu0 0.0
    %790 = vmatpush1.msra.mxu0 0.0
    %791 = vmatprep.subr.mxu0 0.0
    %792 = vmatpush1.msra.mxu0 0.0
    %793 = vmatprep.subr.mxu0 0.0
    %794 = vmatpush1.msra.mxu0 0.0
    %795 = vmatprep.subr.mxu0 0.0
    %796 = vmatpush1.msra.mxu0 0.0
    %797 = vmatprep.subr.mxu0 0.0
    %798 = vmatpush1.msra.mxu0 0.0
    %799 = vmatprep.subr.mxu0 0.0
    %800 = vmatpush1.msra.mxu0 0.0
    %801 = vmatprep.subr.mxu0 0.0
    %802 = vmatpush1.msra.mxu0 0.0
    %803 = vmatprep.subr.mxu0 0.0
    %804 = vmatpush1.msra.mxu0 0.0
    %805 = vmatprep.subr.mxu0 0.0
    %806 = vmatpush1.msra.mxu0 0.0
    %807 = vmatprep.subr.mxu0 0.0
    %808 = vmatpush1.msra.mxu0 0.0
    %809 = vmatprep.subr.mxu0 0.0
    %810 = vmatpush1.msra.mxu0 0.0
    %811 = vmatprep.mubr.f32.mxu0 0.0
    %812 = vmatmul.mubr.f32.gmra.mrb[0].mxu0 %v674
    %v813 = vpop.f32.mrb[0].mxu0
    %v814 = vadd.f32 0.0, %v813
    %v815 = vpop.f32.mrb[0].mxu0
    %816 = vdwg.mxu0
    %v817 = vadd.f32 %v469, %v743
    %v818 = vsub.f32 0.0, %v817
    %v819 = vmul.f32 %v818, 1.442695
    %v820 = vpow.pop %v819
    %v821 = vadd.f32 %v820, 1.0
    %v822 = vrcp.pop %v821
    %v823 = vadd.f32 %v471, %v745
    %v824 = vsub.f32 0.0, %v823
    %v825 = vmul.f32 %v824, 1.442695
    %v826 = vpow.pop %v825
    %v827 = vadd.f32 %v826, 1.0
    %v828 = vrcp.pop %v827
    %v829 = vadd.f32 %v814, %v671
    %v830 = vmul.f32 %v822, %v829
    %v831 = vadd.f32 %v594, %v830
    %v832 = vtanh.pop %v831
    %v833 = vsub.f32 1.0, %v828
    %v834 = vmul.f32 %v833, %v832
    %v835 = vmul.f32 %v828, 0.0
    %v836 = vadd.f32 %v834, %v835
    %837 = vst.msk [vmem:[%s6] sm:$0xff] %vm371, %v836
    %v839 = vsel %vm371, %v836, 0
    %841 = vmatprep.subr.mxu0 %v643
    %842 = vmatpush1.msra.mxu0 %v642
    %843 = vmatprep.subr.mxu0 %v646
    %844 = vmatpush1.msra.mxu0 %v645
    %845 = vmatprep.subr.mxu0 %v649
    %846 = vmatpush1.msra.mxu0 %v648
    %847 = vmatprep.subr.mxu0 %v652
    %848 = vmatpush1.msra.mxu0 %v651
    %849 = vmatprep.subr.mxu0 %v655
    %850 = vmatpush1.msra.mxu0 %v654
    %851 = vmatprep.subr.mxu0 %v658
    %852 = vmatpush1.msra.mxu0 %v657
    %853 = vmatprep.subr.mxu0 %v661
    %854 = vmatpush1.msra.mxu0 %v660
    %855 = vmatprep.subr.mxu0 %v664
    %856 = vmatpush1.msra.mxu0 %v663
    %857 = vmatprep.subr.mxu0 0.0
    %858 = vmatpush1.msra.mxu0 0.0
    %859 = vmatprep.subr.mxu0 0.0
    %860 = vmatpush1.msra.mxu0 0.0
    %861 = vmatprep.subr.mxu0 0.0
    %862 = vmatpush1.msra.mxu0 0.0
    %863 = vmatprep.subr.mxu0 0.0
    %864 = vmatpush1.msra.mxu0 0.0
    %865 = vmatprep.subr.mxu0 0.0
    %866 = vmatpush1.msra.mxu0 0.0
    %867 = vmatprep.subr.mxu0 0.0
    %868 = vmatpush1.msra.mxu0 0.0
    %869 = vmatprep.subr.mxu0 0.0
    %870 = vmatpush1.msra.mxu0 0.0
    %871 = vmatprep.subr.mxu0 0.0
    %872 = vmatpush1.msra.mxu0 0.0
    %873 = vmatprep.subr.mxu0 0.0
    %874 = vmatpush1.msra.mxu0 0.0
    %875 = vmatprep.subr.mxu0 0.0
    %876 = vmatpush1.msra.mxu0 0.0
    %877 = vmatprep.subr.mxu0 0.0
    %878 = vmatpush1.msra.mxu0 0.0
    %879 = vmatprep.subr.mxu0 0.0
    %880 = vmatpush1.msra.mxu0 0.0
    %881 = vmatprep.subr.mxu0 0.0
    %882 = vmatpush1.msra.mxu0 0.0
    %883 = vmatprep.subr.mxu0 0.0
    %884 = vmatpush1.msra.mxu0 0.0
    %885 = vmatprep.subr.mxu0 0.0
    %886 = vmatpush1.msra.mxu0 0.0
    %887 = vmatprep.subr.mxu0 0.0
    %888 = vmatpush1.msra.mxu0 0.0
    %889 = vmatprep.subr.mxu0 0.0
    %890 = vmatpush1.msra.mxu0 0.0
    %891 = vmatprep.subr.mxu0 0.0
    %892 = vmatpush1.msra.mxu0 0.0
    %893 = vmatprep.subr.mxu0 0.0
    %894 = vmatpush1.msra.mxu0 0.0
    %895 = vmatprep.subr.mxu0 0.0
    %896 = vmatpush1.msra.mxu0 0.0
    %897 = vmatprep.subr.mxu0 0.0
    %898 = vmatpush1.msra.mxu0 0.0
    %899 = vmatprep.subr.mxu0 0.0
    %900 = vmatpush1.msra.mxu0 0.0
    %901 = vmatprep.subr.mxu0 0.0
    %902 = vmatpush1.msra.mxu0 0.0
    %903 = vmatprep.subr.mxu0 0.0
    %904 = vmatpush1.msra.mxu0 0.0
    %905 = vmatprep.mubr.f32.mxu0 0.0
    %906 = vmatmul.mubr.f32.gmra.mrb[0].mxu0 %v839
    %v907 = vpop.f32.mrb[0].mxu0
    %v908 = vadd.f32 0.0, %v907
    %v909 = vpop.f32.mrb[0].mxu0
    %v910 = vadd.f32 0.0, %v909
    %911 = vdwg.mxu0
    %912 = vmatprep.subr.mxu0 0.0
    %913 = vmatpush1.msra.mxu0 %v644
    %914 = vmatprep.subr.mxu0 0.0
    %915 = vmatpush1.msra.mxu0 %v647
    %916 = vmatprep.subr.mxu0 0.0
    %917 = vmatpush1.msra.mxu0 %v650
    %918 = vmatprep.subr.mxu0 0.0
    %919 = vmatpush1.msra.mxu0 %v653
    %920 = vmatprep.subr.mxu0 0.0
    %921 = vmatpush1.msra.mxu0 %v656
    %922 = vmatprep.subr.mxu0 0.0
    %923 = vmatpush1.msra.mxu0 %v659
    %924 = vmatprep.subr.mxu0 0.0
    %925 = vmatpush1.msra.mxu0 %v662
    %926 = vmatprep.subr.mxu0 0.0
    %927 = vmatpush1.msra.mxu0 %v665
    %928 = vmatprep.subr.mxu0 0.0
    %929 = vmatpush1.msra.mxu0 0.0
    %930 = vmatprep.subr.mxu0 0.0
    %931 = vmatpush1.msra.mxu0 0.0
    %932 = vmatprep.subr.mxu0 0.0
    %933 = vmatpush1.msra.mxu0 0.0
    %934 = vmatprep.subr.mxu0 0.0
    %935 = vmatpush1.msra.mxu0 0.0
    %936 = vmatprep.subr.mxu0 0.0
    %937 = vmatpush1.msra.mxu0 0.0
    %938 = vmatprep.subr.mxu0 0.0
    %939 = vmatpush1.msra.mxu0 0.0
    %940 = vmatprep.subr.mxu0 0.0
    %941 = vmatpush1.msra.mxu0 0.0
    %942 = vmatprep.subr.mxu0 0.0
    %943 = vmatpush1.msra.mxu0 0.0
    %944 = vmatprep.subr.mxu0 0.0
    %945 = vmatpush1.msra.mxu0 0.0
    %946 = vmatprep.subr.mxu0 0.0
    %947 = vmatpush1.msra.mxu0 0.0
    %948 = vmatprep.subr.mxu0 0.0
    %949 = vmatpush1.msra.mxu0 0.0
    %950 = vmatprep.subr.mxu0 0.0
    %951 = vmatpush1.msra.mxu0 0.0
    %952 = vmatprep.subr.mxu0 0.0
    %953 = vmatpush1.msra.mxu0 0.0
    %954 = vmatprep.subr.mxu0 0.0
    %955 = vmatpush1.msra.mxu0 0.0
    %956 = vmatprep.subr.mxu0 0.0
    %957 = vmatpush1.msra.mxu0 0.0
    %958 = vmatprep.subr.mxu0 0.0
    %959 = vmatpush1.msra.mxu0 0.0
    %960 = vmatprep.subr.mxu0 0.0
    %961 = vmatpush1.msra.mxu0 0.0
    %962 = vmatprep.subr.mxu0 0.0
    %963 = vmatpush1.msra.mxu0 0.0
    %964 = vmatprep.subr.mxu0 0.0
    %965 = vmatpush1.msra.mxu0 0.0
    %966 = vmatprep.subr.mxu0 0.0
    %967 = vmatpush1.msra.mxu0 0.0
    %968 = vmatprep.subr.mxu0 0.0
    %969 = vmatpush1.msra.mxu0 0.0
    %970 = vmatprep.subr.mxu0 0.0
    %971 = vmatpush1.msra.mxu0 0.0
    %972 = vmatprep.subr.mxu0 0.0
    %973 = vmatpush1.msra.mxu0 0.0
    %974 = vmatprep.subr.mxu0 0.0
    %975 = vmatpush1.msra.mxu0 0.0
    %976 = vmatprep.mubr.f32.mxu0 0.0
    %977 = vmatmul.mubr.f32.gmra.mrb[0].mxu0 %v839
    %v978 = vpop.f32.mrb[0].mxu0
    %v979 = vadd.f32 0.0, %v978
    %v980 = vpop.f32.mrb[0].mxu0
    %981 = vdwg.mxu0
    %v982 = vadd.f32 %v475, %v908
    %v983 = vsub.f32 0.0, %v982
    %v984 = vmul.f32 %v983, 1.442695
    %v985 = vpow.pop %v984
    %v986 = vadd.f32 %v985, 1.0
    %v987 = vrcp.pop %v986
    %v988 = vadd.f32 %v477, %v910
    %v989 = vsub.f32 0.0, %v988
    %v990 = vmul.f32 %v989, 1.442695
    %v991 = vpow.pop %v990
    %v992 = vadd.f32 %v991, 1.0
    %v993 = vrcp.pop %v992
    %v994 = vadd.f32 %v979, %v671
    %v995 = vmul.f32 %v987, %v994
    %v996 = vadd.f32 %v599, %v995
    %v997 = vtanh.pop %v996
    %v998 = vsub.f32 1.0, %v993
    %v999 = vmul.f32 %v998, %v997
    %v1000 = vmul.f32 %v993, %v836
    %v1001 = vadd.f32 %v999, %v1000
    %s1002 = scalar_lea.vmem %s6, 8
    %1003 = vst.msk [vmem:[%s1002] sm:$0xff] %vm371, %v1001
    %v1005 = vsel %vm371, %v1001, 0
    %1007 = vmatprep.subr.mxu0 %v643
    %1008 = vmatpush1.msra.mxu0 %v642
    %1009 = vmatprep.subr.mxu0 %v646
    %1010 = vmatpush1.msra.mxu0 %v645
    %1011 = vmatprep.subr.mxu0 %v649
    %1012 = vmatpush1.msra.mxu0 %v648
    %1013 = vmatprep.subr.mxu0 %v652
    %1014 = vmatpush1.msra.mxu0 %v651
    %1015 = vmatprep.subr.mxu0 %v655
    %1016 = vmatpush1.msra.mxu0 %v654
    %1017 = vmatprep.subr.mxu0 %v658
    %1018 = vmatpush1.msra.mxu0 %v657
    %1019 = vmatprep.subr.mxu0 %v661
    %1020 = vmatpush1.msra.mxu0 %v660
    %1021 = vmatprep.subr.mxu0 %v664
    %1022 = vmatpush1.msra.mxu0 %v663
    %1023 = vmatprep.subr.mxu0 0.0
    %1024 = vmatpush1.msra.mxu0 0.0
    %1025 = vmatprep.subr.mxu0 0.0
    %1026 = vmatpush1.msra.mxu0 0.0
    %1027 = vmatprep.subr.mxu0 0.0
    %1028 = vmatpush1.msra.mxu0 0.0
    %1029 = vmatprep.subr.mxu0 0.0
    %1030 = vmatpush1.msra.mxu0 0.0
    %1031 = vmatprep.subr.mxu0 0.0
    %1032 = vmatpush1.msra.mxu0 0.0
    %1033 = vmatprep.subr.mxu0 0.0
    %1034 = vmatpush1.msra.mxu0 0.0
    %1035 = vmatprep.subr.mxu0 0.0
    %1036 = vmatpush1.msra.mxu0 0.0
    %1037 = vmatprep.subr.mxu0 0.0
    %1038 = vmatpush1.msra.mxu0 0.0
    %1039 = vmatprep.subr.mxu0 0.0
    %1040 = vmatpush1.msra.mxu0 0.0
    %1041 = vmatprep.subr.mxu0 0.0
    %1042 = vmatpush1.msra.mxu0 0.0
    %1043 = vmatprep.subr.mxu0 0.0
    %1044 = vmatpush1.msra.mxu0 0.0
    %1045 = vmatprep.subr.mxu0 0.0
    %1046 = vmatpush1.msra.mxu0 0.0
    %1047 = vmatprep.subr.mxu0 0.0
    %1048 = vmatpush1.msra.mxu0 0.0
    %1049 = vmatprep.subr.mxu0 0.0
    %1050 = vmatpush1.msra.mxu0 0.0
    %1051 = vmatprep.subr.mxu0 0.0
    %1052 = vmatpush1.msra.mxu0 0.0
    %1053 = vmatprep.subr.mxu0 0.0
    %1054 = vmatpush1.msra.mxu0 0.0
    %1055 = vmatprep.subr.mxu0 0.0
    %1056 = vmatpush1.msra.mxu0 0.0
    %1057 = vmatprep.subr.mxu0 0.0
    %1058 = vmatpush1.msra.mxu0 0.0
    %1059 = vmatprep.subr.mxu0 0.0
    %1060 = vmatpush1.msra.mxu0 0.0
    %1061 = vmatprep.subr.mxu0 0.0
    %1062 = vmatpush1.msra.mxu0 0.0
    %1063 = vmatprep.subr.mxu0 0.0
    %1064 = vmatpush1.msra.mxu0 0.0
    %1065 = vmatprep.subr.mxu0 0.0
    %1066 = vmatpush1.msra.mxu0 0.0
    %1067 = vmatprep.subr.mxu0 0.0
    %1068 = vmatpush1.msra.mxu0 0.0
    %1069 = vmatprep.subr.mxu0 0.0
    %1070 = vmatpush1.msra.mxu0 0.0
    %1071 = vmatprep.mubr.f32.mxu0 0.0
    %1072 = vmatmul.mubr.f32.gmra.mrb[0].mxu0 %v1005
    %v1073 = vpop.f32.mrb[0].mxu0
    %v1074 = vadd.f32 0.0, %v1073
    %v1075 = vpop.f32.mrb[0].mxu0
    %v1076 = vadd.f32 0.0, %v1075
    %1077 = vdwg.mxu0
    %1078 = vmatprep.subr.mxu0 0.0
    %1079 = vmatpush1.msra.mxu0 %v644
    %1080 = vmatprep.subr.mxu0 0.0
    %1081 = vmatpush1.msra.mxu0 %v647
    %1082 = vmatprep.subr.mxu0 0.0
    %1083 = vmatpush1.msra.mxu0 %v650
    %1084 = vmatprep.subr.mxu0 0.0
    %1085 = vmatpush1.msra.mxu0 %v653
    %1086 = vmatprep.subr.mxu0 0.0
    %1087 = vmatpush1.msra.mxu0 %v656
    %1088 = vmatprep.subr.mxu0 0.0
    %1089 = vmatpush1.msra.mxu0 %v659
    %1090 = vmatprep.subr.mxu0 0.0
    %1091 = vmatpush1.msra.mxu0 %v662
    %1092 = vmatprep.subr.mxu0 0.0
    %1093 = vmatpush1.msra.mxu0 %v665
    %1094 = vmatprep.subr.mxu0 0.0
    %1095 = vmatpush1.msra.mxu0 0.0
    %1096 = vmatprep.subr.mxu0 0.0
    %1097 = vmatpush1.msra.mxu0 0.0
    %1098 = vmatprep.subr.mxu0 0.0
    %1099 = vmatpush1.msra.mxu0 0.0
    %1100 = vmatprep.subr.mxu0 0.0
    %1101 = vmatpush1.msra.mxu0 0.0
    %1102 = vmatprep.subr.mxu0 0.0
    %1103 = vmatpush1.msra.mxu0 0.0
    %1104 = vmatprep.subr.mxu0 0.0
    %1105 = vmatpush1.msra.mxu0 0.0
    %1106 = vmatprep.subr.mxu0 0.0
    %1107 = vmatpush1.msra.mxu0 0.0
    %1108 = vmatprep.subr.mxu0 0.0
    %1109 = vmatpush1.msra.mxu0 0.0
    %1110 = vmatprep.subr.mxu0 0.0
    %1111 = vmatpush1.msra.mxu0 0.0
    %1112 = vmatprep.subr.mxu0 0.0
    %1113 = vmatpush1.msra.mxu0 0.0
    %1114 = vmatprep.subr.mxu0 0.0
    %1115 = vmatpush1.msra.mxu0 0.0
    %1116 = vmatprep.subr.mxu0 0.0
    %1117 = vmatpush1.msra.mxu0 0.0
    %1118 = vmatprep.subr.mxu0 0.0
    %1119 = vmatpush1.msra.mxu0 0.0
    %1120 = vmatprep.subr.mxu0 0.0
    %1121 = vmatpush1.msra.mxu0 0.0
    %1122 = vmatprep.subr.mxu0 0.0
    %1123 = vmatpush1.msra.mxu0 0.0
    %1124 = vmatprep.subr.mxu0 0.0
    %1125 = vmatpush1.msra.mxu0 0.0
    %1126 = vmatprep.subr.mxu0 0.0
    %1127 = vmatpush1.msra.mxu0 0.0
    %1128 = vmatprep.subr.mxu0 0.0
    %1129 = vmatpush1.msra.mxu0 0.0
    %1130 = vmatprep.subr.mxu0 0.0
    %1131 = vmatpush1.msra.mxu0 0.0
    %1132 = vmatprep.subr.mxu0 0.0
    %1133 = vmatpush1.msra.mxu0 0.0
    %1134 = vmatprep.subr.mxu0 0.0
    %1135 = vmatpush1.msra.mxu0 0.0
    %1136 = vmatprep.subr.mxu0 0.0
    %1137 = vmatpush1.msra.mxu0 0.0
    %1138 = vmatprep.subr.mxu0 0.0
    %1139 = vmatpush1.msra.mxu0 0.0
    %1140 = vmatprep.subr.mxu0 0.0
    %1141 = vmatpush1.msra.mxu0 0.0
    %1142 = vmatprep.mubr.f32.mxu0 0.0
    %1143 = vmatmul.mubr.f32.gmra.mrb[0].mxu0 %v1005
    %v1144 = vpop.f32.mrb[0].mxu0
    %v1145 = vadd.f32 0.0, %v1144
    %v1146 = vpop.f32.mrb[0].mxu0
    %1147 = vdwg.mxu0
    %v1148 = vadd.f32 %v481, %v1074
    %v1149 = vsub.f32 0.0, %v1148
    %v1150 = vmul.f32 %v1149, 1.442695
    %v1151 = vpow.pop %v1150
    %v1152 = vadd.f32 %v1151, 1.0
    %v1153 = vrcp.pop %v1152
    %v1154 = vadd.f32 %v483, %v1076
    %v1155 = vsub.f32 0.0, %v1154
    %v1156 = vmul.f32 %v1155, 1.442695
    %v1157 = vpow.pop %v1156
    %v1158 = vadd.f32 %v1157, 1.0
    %v1159 = vrcp.pop %v1158
    %v1160 = vadd.f32 %v1145, %v671
    %v1161 = vmul.f32 %v1153, %v1160
    %v1162 = vadd.f32 %v604, %v1161
    %v1163 = vtanh.pop %v1162
    %v1164 = vsub.f32 1.0, %v1159
    %v1165 = vmul.f32 %v1164, %v1163
    %v1166 = vmul.f32 %v1159, %v1001
    %v1167 = vadd.f32 %v1165, %v1166
    %s1168 = scalar_lea.vmem %s6, 16
    %1169 = vst.msk [vmem:[%s1168] sm:$0xff] %vm371, %v1167
    %v1171 = vsel %vm371, %v1167, 0
    %1173 = vmatprep.subr.mxu0 %v643
    %1174 = vmatpush1.msra.mxu0 %v642
    %1175 = vmatprep.subr.mxu0 %v646
    %1176 = vmatpush1.msra.mxu0 %v645
    %1177 = vmatprep.subr.mxu0 %v649
    %1178 = vmatpush1.msra.mxu0 %v648
    %1179 = vmatprep.subr.mxu0 %v652
    %1180 = vmatpush1.msra.mxu0 %v651
    %1181 = vmatprep.subr.mxu0 %v655
    %1182 = vmatpush1.msra.mxu0 %v654
    %1183 = vmatprep.subr.mxu0 %v658
    %1184 = vmatpush1.msra.mxu0 %v657
    %1185 = vmatprep.subr.mxu0 %v661
    %1186 = vmatpush1.msra.mxu0 %v660
    %1187 = vmatprep.subr.mxu0 %v664
    %1188 = vmatpush1.msra.mxu0 %v663
    %1189 = vmatprep.subr.mxu0 0.0
    %1190 = vmatpush1.msra.mxu0 0.0
    %1191 = vmatprep.subr.mxu0 0.0
    %1192 = vmatpush1.msra.mxu0 0.0
    %1193 = vmatprep.subr.mxu0 0.0
    %1194 = vmatpush1.msra.mxu0 0.0
    %1195 = vmatprep.subr.mxu0 0.0
    %1196 = vmatpush1.msra.mxu0 0.0
    %1197 = vmatprep.subr.mxu0 0.0
    %1198 = vmatpush1.msra.mxu0 0.0
    %1199 = vmatprep.subr.mxu0 0.0
    %1200 = vmatpush1.msra.mxu0 0.0
    %1201 = vmatprep.subr.mxu0 0.0
    %1202 = vmatpush1.msra.mxu0 0.0
    %1203 = vmatprep.subr.mxu0 0.0
    %1204 = vmatpush1.msra.mxu0 0.0
    %1205 = vmatprep.subr.mxu0 0.0
    %1206 = vmatpush1.msra.mxu0 0.0
    %1207 = vmatprep.subr.mxu0 0.0
    %1208 = vmatpush1.msra.mxu0 0.0
    %1209 = vmatprep.subr.mxu0 0.0
    %1210 = vmatpush1.msra.mxu0 0.0
    %1211 = vmatprep.subr.mxu0 0.0
    %1212 = vmatpush1.msra.mxu0 0.0
    %1213 = vmatprep.subr.mxu0 0.0
    %1214 = vmatpush1.msra.mxu0 0.0
    %1215 = vmatprep.subr.mxu0 0.0
    %1216 = vmatpush1.msra.mxu0 0.0
    %1217 = vmatprep.subr.mxu0 0.0
    %1218 = vmatpush1.msra.mxu0 0.0
    %1219 = vmatprep.subr.mxu0 0.0
    %1220 = vmatpush1.msra.mxu0 0.0
    %1221 = vmatprep.subr.mxu0 0.0
    %1222 = vmatpush1.msra.mxu0 0.0
    %1223 = vmatprep.subr.mxu0 0.0
    %1224 = vmatpush1.msra.mxu0 0.0
    %1225 = vmatprep.subr.mxu0 0.0
    %1226 = vmatpush1.msra.mxu0 0.0
    %1227 = vmatprep.subr.mxu0 0.0
    %1228 = vmatpush1.msra.mxu0 0.0
    %1229 = vmatprep.subr.mxu0 0.0
    %1230 = vmatpush1.msra.mxu0 0.0
    %1231 = vmatprep.subr.mxu0 0.0
    %1232 = vmatpush1.msra.mxu0 0.0
    %1233 = vmatprep.subr.mxu0 0.0
    %1234 = vmatpush1.msra.mxu0 0.0
    %1235 = vmatprep.subr.mxu0 0.0
    %1236 = vmatpush1.msra.mxu0 0.0
    %1237 = vmatprep.mubr.f32.mxu0 0.0
    %1238 = vmatmul.mubr.f32.gmra.mrb[0].mxu0 %v1171
    %v1239 = vpop.f32.mrb[0].mxu0
    %v1240 = vadd.f32 0.0, %v1239
    %v1241 = vpop.f32.mrb[0].mxu0
    %v1242 = vadd.f32 0.0, %v1241
    %1243 = vdwg.mxu0
    %1244 = vmatprep.subr.mxu0 0.0
    %1245 = vmatpush1.msra.mxu0 %v644
    %1246 = vmatprep.subr.mxu0 0.0
    %1247 = vmatpush1.msra.mxu0 %v647
    %1248 = vmatprep.subr.mxu0 0.0
    %1249 = vmatpush1.msra.mxu0 %v650
    %1250 = vmatprep.subr.mxu0 0.0
    %1251 = vmatpush1.msra.mxu0 %v653
    %1252 = vmatprep.subr.mxu0 0.0
    %1253 = vmatpush1.msra.mxu0 %v656
    %1254 = vmatprep.subr.mxu0 0.0
    %1255 = vmatpush1.msra.mxu0 %v659
    %1256 = vmatprep.subr.mxu0 0.0
    %1257 = vmatpush1.msra.mxu0 %v662
    %1258 = vmatprep.subr.mxu0 0.0
    %1259 = vmatpush1.msra.mxu0 %v665
    %1260 = vmatprep.subr.mxu0 0.0
    %1261 = vmatpush1.msra.mxu0 0.0
    %1262 = vmatprep.subr.mxu0 0.0
    %1263 = vmatpush1.msra.mxu0 0.0
    %1264 = vmatprep.subr.mxu0 0.0
    %1265 = vmatpush1.msra.mxu0 0.0
    %1266 = vmatprep.subr.mxu0 0.0
    %1267 = vmatpush1.msra.mxu0 0.0
    %1268 = vmatprep.subr.mxu0 0.0
    %1269 = vmatpush1.msra.mxu0 0.0
    %1270 = vmatprep.subr.mxu0 0.0
    %1271 = vmatpush1.msra.mxu0 0.0
    %1272 = vmatprep.subr.mxu0 0.0
    %1273 = vmatpush1.msra.mxu0 0.0
    %1274 = vmatprep.subr.mxu0 0.0
    %1275 = vmatpush1.msra.mxu0 0.0
    %1276 = vmatprep.subr.mxu0 0.0
    %1277 = vmatpush1.msra.mxu0 0.0
    %1278 = vmatprep.subr.mxu0 0.0
    %1279 = vmatpush1.msra.mxu0 0.0
    %1280 = vmatprep.subr.mxu0 0.0
    %1281 = vmatpush1.msra.mxu0 0.0
    %1282 = vmatprep.subr.mxu0 0.0
    %1283 = vmatpush1.msra.mxu0 0.0
    %1284 = vmatprep.subr.mxu0 0.0
    %1285 = vmatpush1.msra.mxu0 0.0
    %1286 = vmatprep.subr.mxu0 0.0
    %1287 = vmatpush1.msra.mxu0 0.0
    %1288 = vmatprep.subr.mxu0 0.0
    %1289 = vmatpush1.msra.mxu0 0.0
    %1290 = vmatprep.subr.mxu0 0.0
    %1291 = vmatpush1.msra.mxu0 0.0
    %1292 = vmatprep.subr.mxu0 0.0
    %1293 = vmatpush1.msra.mxu0 0.0
    %1294 = vmatprep.subr.mxu0 0.0
    %1295 = vmatpush1.msra.mxu0 0.0
    %1296 = vmatprep.subr.mxu0 0.0
    %1297 = vmatpush1.msra.mxu0 0.0
    %1298 = vmatprep.subr.mxu0 0.0
    %1299 = vmatpush1.msra.mxu0 0.0
    %1300 = vmatprep.subr.mxu0 0.0
    %1301 = vmatpush1.msra.mxu0 0.0
    %1302 = vmatprep.subr.mxu0 0.0
    %1303 = vmatpush1.msra.mxu0 0.0
    %1304 = vmatprep.subr.mxu0 0.0
    %1305 = vmatpush1.msra.mxu0 0.0
    %1306 = vmatprep.subr.mxu0 0.0
    %1307 = vmatpush1.msra.mxu0 0.0
    %1308 = vmatprep.mubr.f32.mxu0 0.0
    %1309 = vmatmul.mubr.f32.gmra.mrb[0].mxu0 %v1171
    %v1310 = vpop.f32.mrb[0].mxu0
    %v1311 = vadd.f32 0.0, %v1310
    %v1312 = vpop.f32.mrb[0].mxu0
    %1313 = vdwg.mxu0
    %v1314 = vadd.f32 %v487, %v1240
    %v1315 = vsub.f32 0.0, %v1314
    %v1316 = vmul.f32 %v1315, 1.442695
    %v1317 = vpow.pop %v1316
    %v1318 = vadd.f32 %v1317, 1.0
    %v1319 = vrcp.pop %v1318
    %v1320 = vadd.f32 %v489, %v1242
    %v1321 = vsub.f32 0.0, %v1320
    %v1322 = vmul.f32 %v1321, 1.442695
    %v1323 = vpow.pop %v1322
    %v1324 = vadd.f32 %v1323, 1.0
    %v1325 = vrcp.pop %v1324
    %v1326 = vadd.f32 %v1311, %v671
    %v1327 = vmul.f32 %v1319, %v1326
    %v1328 = vadd.f32 %v609, %v1327
    %v1329 = vtanh.pop %v1328
    %v1330 = vsub.f32 1.0, %v1325
    %v1331 = vmul.f32 %v1330, %v1329
    %v1332 = vmul.f32 %v1325, %v1167
    %v1333 = vadd.f32 %v1331, %v1332
    %s1334 = scalar_lea.vmem %s6, 24
    %1335 = vst.msk [vmem:[%s1334] sm:$0xff] %vm371, %v1333
    %v1337 = vsel %vm371, %v1333, 0
    %1339 = vmatprep.subr.mxu0 %v643
    %1340 = vmatpush1.msra.mxu0 %v642
    %1341 = vmatprep.subr.mxu0 %v646
    %1342 = vmatpush1.msra.mxu0 %v645
    %1343 = vmatprep.subr.mxu0 %v649
    %1344 = vmatpush1.msra.mxu0 %v648
    %1345 = vmatprep.subr.mxu0 %v652
    %1346 = vmatpush1.msra.mxu0 %v651
    %1347 = vmatprep.subr.mxu0 %v655
    %1348 = vmatpush1.msra.mxu0 %v654
    %1349 = vmatprep.subr.mxu0 %v658
    %1350 = vmatpush1.msra.mxu0 %v657
    %1351 = vmatprep.subr.mxu0 %v661
    %1352 = vmatpush1.msra.mxu0 %v660
    %1353 = vmatprep.subr.mxu0 %v664
    %1354 = vmatpush1.msra.mxu0 %v663
    %1355 = vmatprep.subr.mxu0 0.0
    %1356 = vmatpush1.msra.mxu0 0.0
    %1357 = vmatprep.subr.mxu0 0.0
    %1358 = vmatpush1.msra.mxu0 0.0
    %1359 = vmatprep.subr.mxu0 0.0
    %1360 = vmatpush1.msra.mxu0 0.0
    %1361 = vmatprep.subr.mxu0 0.0
    %1362 = vmatpush1.msra.mxu0 0.0
    %1363 = vmatprep.subr.mxu0 0.0
    %1364 = vmatpush1.msra.mxu0 0.0
    %1365 = vmatprep.subr.mxu0 0.0
    %1366 = vmatpush1.msra.mxu0 0.0
    %1367 = vmatprep.subr.mxu0 0.0
    %1368 = vmatpush1.msra.mxu0 0.0
    %1369 = vmatprep.subr.mxu0 0.0
    %1370 = vmatpush1.msra.mxu0 0.0
    %1371 = vmatprep.subr.mxu0 0.0
    %1372 = vmatpush1.msra.mxu0 0.0
    %1373 = vmatprep.subr.mxu0 0.0
    %1374 = vmatpush1.msra.mxu0 0.0
    %1375 = vmatprep.subr.mxu0 0.0
    %1376 = vmatpush1.msra.mxu0 0.0
    %1377 = vmatprep.subr.mxu0 0.0
    %1378 = vmatpush1.msra.mxu0 0.0
    %1379 = vmatprep.subr.mxu0 0.0
    %1380 = vmatpush1.msra.mxu0 0.0
    %1381 = vmatprep.subr.mxu0 0.0
    %1382 = vmatpush1.msra.mxu0 0.0
    %1383 = vmatprep.subr.mxu0 0.0
    %1384 = vmatpush1.msra.mxu0 0.0
    %1385 = vmatprep.subr.mxu0 0.0
    %1386 = vmatpush1.msra.mxu0 0.0
    %1387 = vmatprep.subr.mxu0 0.0
    %1388 = vmatpush1.msra.mxu0 0.0
    %1389 = vmatprep.subr.mxu0 0.0
    %1390 = vmatpush1.msra.mxu0 0.0
    %1391 = vmatprep.subr.mxu0 0.0
    %1392 = vmatpush1.msra.mxu0 0.0
    %1393 = vmatprep.subr.mxu0 0.0
    %1394 = vmatpush1.msra.mxu0 0.0
    %1395 = vmatprep.subr.mxu0 0.0
    %1396 = vmatpush1.msra.mxu0 0.0
    %1397 = vmatprep.subr.mxu0 0.0
    %1398 = vmatpush1.msra.mxu0 0.0
    %1399 = vmatprep.subr.mxu0 0.0
    %1400 = vmatpush1.msra.mxu0 0.0
    %1401 = vmatprep.subr.mxu0 0.0
    %1402 = vmatpush1.msra.mxu0 0.0
    %1403 = vmatprep.mubr.f32.mxu0 0.0
    %1404 = vmatmul.mubr.f32.gmra.mrb[0].mxu0 %v1337
    %v1405 = vpop.f32.mrb[0].mxu0
    %v1406 = vadd.f32 0.0, %v1405
    %v1407 = vpop.f32.mrb[0].mxu0
    %v1408 = vadd.f32 0.0, %v1407
    %1409 = vdwg.mxu0
    %1410 = vmatprep.subr.mxu0 0.0
    %1411 = vmatpush1.msra.mxu0 %v644
    %1412 = vmatprep.subr.mxu0 0.0
    %1413 = vmatpush1.msra.mxu0 %v647
    %1414 = vmatprep.subr.mxu0 0.0
    %1415 = vmatpush1.msra.mxu0 %v650
    %1416 = vmatprep.subr.mxu0 0.0
    %1417 = vmatpush1.msra.mxu0 %v653
    %1418 = vmatprep.subr.mxu0 0.0
    %1419 = vmatpush1.msra.mxu0 %v656
    %1420 = vmatprep.subr.mxu0 0.0
    %1421 = vmatpush1.msra.mxu0 %v659
    %1422 = vmatprep.subr.mxu0 0.0
    %1423 = vmatpush1.msra.mxu0 %v662
    %1424 = vmatprep.subr.mxu0 0.0
    %1425 = vmatpush1.msra.mxu0 %v665
    %1426 = vmatprep.subr.mxu0 0.0
    %1427 = vmatpush1.msra.mxu0 0.0
    %1428 = vmatprep.subr.mxu0 0.0
    %1429 = vmatpush1.msra.mxu0 0.0
    %1430 = vmatprep.subr.mxu0 0.0
    %1431 = vmatpush1.msra.mxu0 0.0
    %1432 = vmatprep.subr.mxu0 0.0
    %1433 = vmatpush1.msra.mxu0 0.0
    %1434 = vmatprep.subr.mxu0 0.0
    %1435 = vmatpush1.msra.mxu0 0.0
    %1436 = vmatprep.subr.mxu0 0.0
    %1437 = vmatpush1.msra.mxu0 0.0
    %1438 = vmatprep.subr.mxu0 0.0
    %1439 = vmatpush1.msra.mxu0 0.0
    %1440 = vmatprep.subr.mxu0 0.0
    %1441 = vmatpush1.msra.mxu0 0.0
    %1442 = vmatprep.subr.mxu0 0.0
    %1443 = vmatpush1.msra.mxu0 0.0
    %1444 = vmatprep.subr.mxu0 0.0
    %1445 = vmatpush1.msra.mxu0 0.0
    %1446 = vmatprep.subr.mxu0 0.0
    %1447 = vmatpush1.msra.mxu0 0.0
    %1448 = vmatprep.subr.mxu0 0.0
    %1449 = vmatpush1.msra.mxu0 0.0
    %1450 = vmatprep.subr.mxu0 0.0
    %1451 = vmatpush1.msra.mxu0 0.0
    %1452 = vmatprep.subr.mxu0 0.0
    %1453 = vmatpush1.msra.mxu0 0.0
    %1454 = vmatprep.subr.mxu0 0.0
    %1455 = vmatpush1.msra.mxu0 0.0
    %1456 = vmatprep.subr.mxu0 0.0
    %1457 = vmatpush1.msra.mxu0 0.0
    %1458 = vmatprep.subr.mxu0 0.0
    %1459 = vmatpush1.msra.mxu0 0.0
    %1460 = vmatprep.subr.mxu0 0.0
    %1461 = vmatpush1.msra.mxu0 0.0
    %1462 = vmatprep.subr.mxu0 0.0
    %1463 = vmatpush1.msra.mxu0 0.0
    %1464 = vmatprep.subr.mxu0 0.0
    %1465 = vmatpush1.msra.mxu0 0.0
    %1466 = vmatprep.subr.mxu0 0.0
    %1467 = vmatpush1.msra.mxu0 0.0
    %1468 = vmatprep.subr.mxu0 0.0
    %1469 = vmatpush1.msra.mxu0 0.0
    %1470 = vmatprep.subr.mxu0 0.0
    %1471 = vmatpush1.msra.mxu0 0.0
    %1472 = vmatprep.subr.mxu0 0.0
    %1473 = vmatpush1.msra.mxu0 0.0
    %1474 = vmatprep.mubr.f32.mxu0 0.0
    %1475 = vmatmul.mubr.f32.gmra.mrb[0].mxu0 %v1337
    %v1476 = vpop.f32.mrb[0].mxu0
    %v1477 = vadd.f32 0.0, %v1476
    %v1478 = vpop.f32.mrb[0].mxu0
    %1479 = vdwg.mxu0
    %v1480 = vadd.f32 %v493, %v1406
    %v1481 = vsub.f32 0.0, %v1480
    %v1482 = vmul.f32 %v1481, 1.442695
    %v1483 = vpow.pop %v1482
    %v1484 = vadd.f32 %v1483, 1.0
    %v1485 = vrcp.pop %v1484
    %v1486 = vadd.f32 %v495, %v1408
    %v1487 = vsub.f32 0.0, %v1486
    %v1488 = vmul.f32 %v1487, 1.442695
    %v1489 = vpow.pop %v1488
    %v1490 = vadd.f32 %v1489, 1.0
    %v1491 = vrcp.pop %v1490
    %v1492 = vadd.f32 %v1477, %v671
    %v1493 = vmul.f32 %v1485, %v1492
    %v1494 = vadd.f32 %v614, %v1493
    %v1495 = vtanh.pop %v1494
    %v1496 = vsub.f32 1.0, %v1491
    %v1497 = vmul.f32 %v1496, %v1495
    %v1498 = vmul.f32 %v1491, %v1333
    %v1499 = vadd.f32 %v1497, %v1498
    %s1500 = scalar_lea.vmem %s6, 32
    %1501 = vst.msk [vmem:[%s1500] sm:$0xff] %vm371, %v1499
    %v1503 = vsel %vm371, %v1499, 0
    %1505 = vmatprep.subr.mxu0 %v643
    %1506 = vmatpush1.msra.mxu0 %v642
    %1507 = vmatprep.subr.mxu0 %v646
    %1508 = vmatpush1.msra.mxu0 %v645
    %1509 = vmatprep.subr.mxu0 %v649
    %1510 = vmatpush1.msra.mxu0 %v648
    %1511 = vmatprep.subr.mxu0 %v652
    %1512 = vmatpush1.msra.mxu0 %v651
    %1513 = vmatprep.subr.mxu0 %v655
    %1514 = vmatpush1.msra.mxu0 %v654
    %1515 = vmatprep.subr.mxu0 %v658
    %1516 = vmatpush1.msra.mxu0 %v657
    %1517 = vmatprep.subr.mxu0 %v661
    %1518 = vmatpush1.msra.mxu0 %v660
    %1519 = vmatprep.subr.mxu0 %v664
    %1520 = vmatpush1.msra.mxu0 %v663
    %1521 = vmatprep.subr.mxu0 0.0
    %1522 = vmatpush1.msra.mxu0 0.0
    %1523 = vmatprep.subr.mxu0 0.0
    %1524 = vmatpush1.msra.mxu0 0.0
    %1525 = vmatprep.subr.mxu0 0.0
    %1526 = vmatpush1.msra.mxu0 0.0
    %1527 = vmatprep.subr.mxu0 0.0
    %1528 = vmatpush1.msra.mxu0 0.0
    %1529 = vmatprep.subr.mxu0 0.0
    %1530 = vmatpush1.msra.mxu0 0.0
    %1531 = vmatprep.subr.mxu0 0.0
    %1532 = vmatpush1.msra.mxu0 0.0
    %1533 = vmatprep.subr.mxu0 0.0
    %1534 = vmatpush1.msra.mxu0 0.0
    %1535 = vmatprep.subr.mxu0 0.0
    %1536 = vmatpush1.msra.mxu0 0.0
    %1537 = vmatprep.subr.mxu0 0.0
    %1538 = vmatpush1.msra.mxu0 0.0
    %1539 = vmatprep.subr.mxu0 0.0
    %1540 = vmatpush1.msra.mxu0 0.0
    %1541 = vmatprep.subr.mxu0 0.0
    %1542 = vmatpush1.msra.mxu0 0.0
    %1543 = vmatprep.subr.mxu0 0.0
    %1544 = vmatpush1.msra.mxu0 0.0
    %1545 = vmatprep.subr.mxu0 0.0
    %1546 = vmatpush1.msra.mxu0 0.0
    %1547 = vmatprep.subr.mxu0 0.0
    %1548 = vmatpush1.msra.mxu0 0.0
    %1549 = vmatprep.subr.mxu0 0.0
    %1550 = vmatpush1.msra.mxu0 0.0
    %1551 = vmatprep.subr.mxu0 0.0
    %1552 = vmatpush1.msra.mxu0 0.0
    %1553 = vmatprep.subr.mxu0 0.0
    %1554 = vmatpush1.msra.mxu0 0.0
    %1555 = vmatprep.subr.mxu0 0.0
    %1556 = vmatpush1.msra.mxu0 0.0
    %1557 = vmatprep.subr.mxu0 0.0
    %1558 = vmatpush1.msra.mxu0 0.0
    %1559 = vmatprep.subr.mxu0 0.0
    %1560 = vmatpush1.msra.mxu0 0.0
    %1561 = vmatprep.subr.mxu0 0.0
    %1562 = vmatpush1.msra.mxu0 0.0
    %1563 = vmatprep.subr.mxu0 0.0
    %1564 = vmatpush1.msra.mxu0 0.0
    %1565 = vmatprep.subr.mxu0 0.0
    %1566 = vmatpush1.msra.mxu0 0.0
    %1567 = vmatprep.subr.mxu0 0.0
    %1568 = vmatpush1.msra.mxu0 0.0
    %1569 = vmatprep.mubr.f32.mxu0 0.0
    %1570 = vmatmul.mubr.f32.gmra.mrb[0].mxu0 %v1503
    %v1571 = vpop.f32.mrb[0].mxu0
    %v1572 = vadd.f32 0.0, %v1571
    %v1573 = vpop.f32.mrb[0].mxu0
    %v1574 = vadd.f32 0.0, %v1573
    %1575 = vdwg.mxu0
    %1576 = vmatprep.subr.mxu0 0.0
    %1577 = vmatpush1.msra.mxu0 %v644
    %1578 = vmatprep.subr.mxu0 0.0
    %1579 = vmatpush1.msra.mxu0 %v647
    %1580 = vmatprep.subr.mxu0 0.0
    %1581 = vmatpush1.msra.mxu0 %v650
    %1582 = vmatprep.subr.mxu0 0.0
    %1583 = vmatpush1.msra.mxu0 %v653
    %1584 = vmatprep.subr.mxu0 0.0
    %1585 = vmatpush1.msra.mxu0 %v656
    %1586 = vmatprep.subr.mxu0 0.0
    %1587 = vmatpush1.msra.mxu0 %v659
    %1588 = vmatprep.subr.mxu0 0.0
    %1589 = vmatpush1.msra.mxu0 %v662
    %1590 = vmatprep.subr.mxu0 0.0
    %1591 = vmatpush1.msra.mxu0 %v665
    %1592 = vmatprep.subr.mxu0 0.0
    %1593 = vmatpush1.msra.mxu0 0.0
    %1594 = vmatprep.subr.mxu0 0.0
    %1595 = vmatpush1.msra.mxu0 0.0
    %1596 = vmatprep.subr.mxu0 0.0
    %1597 = vmatpush1.msra.mxu0 0.0
    %1598 = vmatprep.subr.mxu0 0.0
    %1599 = vmatpush1.msra.mxu0 0.0
    %1600 = vmatprep.subr.mxu0 0.0
    %1601 = vmatpush1.msra.mxu0 0.0
    %1602 = vmatprep.subr.mxu0 0.0
    %1603 = vmatpush1.msra.mxu0 0.0
    %1604 = vmatprep.subr.mxu0 0.0
    %1605 = vmatpush1.msra.mxu0 0.0
    %1606 = vmatprep.subr.mxu0 0.0
    %1607 = vmatpush1.msra.mxu0 0.0
    %1608 = vmatprep.subr.mxu0 0.0
    %1609 = vmatpush1.msra.mxu0 0.0
    %1610 = vmatprep.subr.mxu0 0.0
    %1611 = vmatpush1.msra.mxu0 0.0
    %1612 = vmatprep.subr.mxu0 0.0
    %1613 = vmatpush1.msra.mxu0 0.0
    %1614 = vmatprep.subr.mxu0 0.0
    %1615 = vmatpush1.msra.mxu0 0.0
    %1616 = vmatprep.subr.mxu0 0.0
    %1617 = vmatpush1.msra.mxu0 0.0
    %1618 = vmatprep.subr.mxu0 0.0
    %1619 = vmatpush1.msra.mxu0 0.0
    %1620 = vmatprep.subr.mxu0 0.0
    %1621 = vmatpush1.msra.mxu0 0.0
    %1622 = vmatprep.subr.mxu0 0.0
    %1623 = vmatpush1.msra.mxu0 0.0
    %1624 = vmatprep.subr.mxu0 0.0
    %1625 = vmatpush1.msra.mxu0 0.0
    %1626 = vmatprep.subr.mxu0 0.0
    %1627 = vmatpush1.msra.mxu0 0.0
    %1628 = vmatprep.subr.mxu0 0.0
    %1629 = vmatpush1.msra.mxu0 0.0
    %1630 = vmatprep.subr.mxu0 0.0
    %1631 = vmatpush1.msra.mxu0 0.0
    %1632 = vmatprep.subr.mxu0 0.0
    %1633 = vmatpush1.msra.mxu0 0.0
    %1634 = vmatprep.subr.mxu0 0.0
    %1635 = vmatpush1.msra.mxu0 0.0
    %1636 = vmatprep.subr.mxu0 0.0
    %1637 = vmatpush1.msra.mxu0 0.0
    %1638 = vmatprep.subr.mxu0 0.0
    %1639 = vmatpush1.msra.mxu0 0.0
    %1640 = vmatprep.mubr.f32.mxu0 0.0
    %1641 = vmatmul.mubr.f32.gmra.mrb[0].mxu0 %v1503
    %v1642 = vpop.f32.mrb[0].mxu0
    %v1643 = vadd.f32 0.0, %v1642
    %v1644 = vpop.f32.mrb[0].mxu0
    %1645 = vdwg.mxu0
    %v1646 = vadd.f32 %v499, %v1572
    %v1647 = vsub.f32 0.0, %v1646
    %v1648 = vmul.f32 %v1647, 1.442695
    %v1649 = vpow.pop %v1648
    %v1650 = vadd.f32 %v1649, 1.0
    %v1651 = vrcp.pop %v1650
    %v1652 = vadd.f32 %v501, %v1574
    %v1653 = vsub.f32 0.0, %v1652
    %v1654 = vmul.f32 %v1653, 1.442695
    %v1655 = vpow.pop %v1654
    %v1656 = vadd.f32 %v1655, 1.0
    %v1657 = vrcp.pop %v1656
    %v1658 = vadd.f32 %v1643, %v671
    %v1659 = vmul.f32 %v1651, %v1658
    %v1660 = vadd.f32 %v619, %v1659
    %v1661 = vtanh.pop %v1660
    %v1662 = vsub.f32 1.0, %v1657
    %v1663 = vmul.f32 %v1662, %v1661
    %v1664 = vmul.f32 %v1657, %v1499
    %v1665 = vadd.f32 %v1663, %v1664
    %s1666 = scalar_lea.vmem %s6, 40
    %1667 = vst.msk [vmem:[%s1666] sm:$0xff] %vm371, %v1665
    %v1669 = vsel %vm371, %v1665, 0
    %1671 = vmatprep.subr.mxu0 %v643
    %1672 = vmatpush1.msra.mxu0 %v642
    %1673 = vmatprep.subr.mxu0 %v646
    %1674 = vmatpush1.msra.mxu0 %v645
    %1675 = vmatprep.subr.mxu0 %v649
    %1676 = vmatpush1.msra.mxu0 %v648
    %1677 = vmatprep.subr.mxu0 %v652
    %1678 = vmatpush1.msra.mxu0 %v651
    %1679 = vmatprep.subr.mxu0 %v655
    %1680 = vmatpush1.msra.mxu0 %v654
    %1681 = vmatprep.subr.mxu0 %v658
    %1682 = vmatpush1.msra.mxu0 %v657
    %1683 = vmatprep.subr.mxu0 %v661
    %1684 = vmatpush1.msra.mxu0 %v660
    %1685 = vmatprep.subr.mxu0 %v664
    %1686 = vmatpush1.msra.mxu0 %v663
    %1687 = vmatprep.subr.mxu0 0.0
    %1688 = vmatpush1.msra.mxu0 0.0
    %1689 = vmatprep.subr.mxu0 0.0
    %1690 = vmatpush1.msra.mxu0 0.0
    %1691 = vmatprep.subr.mxu0 0.0
    %1692 = vmatpush1.msra.mxu0 0.0
    %1693 = vmatprep.subr.mxu0 0.0
    %1694 = vmatpush1.msra.mxu0 0.0
    %1695 = vmatprep.subr.mxu0 0.0
    %1696 = vmatpush1.msra.mxu0 0.0
    %1697 = vmatprep.subr.mxu0 0.0
    %1698 = vmatpush1.msra.mxu0 0.0
    %1699 = vmatprep.subr.mxu0 0.0
    %1700 = vmatpush1.msra.mxu0 0.0
    %1701 = vmatprep.subr.mxu0 0.0
    %1702 = vmatpush1.msra.mxu0 0.0
    %1703 = vmatprep.subr.mxu0 0.0
    %1704 = vmatpush1.msra.mxu0 0.0
    %1705 = vmatprep.subr.mxu0 0.0
    %1706 = vmatpush1.msra.mxu0 0.0
    %1707 = vmatprep.subr.mxu0 0.0
    %1708 = vmatpush1.msra.mxu0 0.0
    %1709 = vmatprep.subr.mxu0 0.0
    %1710 = vmatpush1.msra.mxu0 0.0
    %1711 = vmatprep.subr.mxu0 0.0
    %1712 = vmatpush1.msra.mxu0 0.0
    %1713 = vmatprep.subr.mxu0 0.0
    %1714 = vmatpush1.msra.mxu0 0.0
    %1715 = vmatprep.subr.mxu0 0.0
    %1716 = vmatpush1.msra.mxu0 0.0
    %1717 = vmatprep.subr.mxu0 0.0
    %1718 = vmatpush1.msra.mxu0 0.0
    %1719 = vmatprep.subr.mxu0 0.0
    %1720 = vmatpush1.msra.mxu0 0.0
    %1721 = vmatprep.subr.mxu0 0.0
    %1722 = vmatpush1.msra.mxu0 0.0
    %1723 = vmatprep.subr.mxu0 0.0
    %1724 = vmatpush1.msra.mxu0 0.0
    %1725 = vmatprep.subr.mxu0 0.0
    %1726 = vmatpush1.msra.mxu0 0.0
    %1727 = vmatprep.subr.mxu0 0.0
    %1728 = vmatpush1.msra.mxu0 0.0
    %1729 = vmatprep.subr.mxu0 0.0
    %1730 = vmatpush1.msra.mxu0 0.0
    %1731 = vmatprep.subr.mxu0 0.0
    %1732 = vmatpush1.msra.mxu0 0.0
    %1733 = vmatprep.subr.mxu0 0.0
    %1734 = vmatpush1.msra.mxu0 0.0
    %1735 = vmatprep.mubr.f32.mxu0 0.0
    %1736 = vmatmul.mubr.f32.gmra.mrb[0].mxu0 %v1669
    %v1737 = vpop.f32.mrb[0].mxu0
    %v1738 = vadd.f32 0.0, %v1737
    %v1739 = vpop.f32.mrb[0].mxu0
    %v1740 = vadd.f32 0.0, %v1739
    %1741 = vdwg.mxu0
    %1742 = vmatprep.subr.mxu0 0.0
    %1743 = vmatpush1.msra.mxu0 %v644
    %1744 = vmatprep.subr.mxu0 0.0
    %1745 = vmatpush1.msra.mxu0 %v647
    %1746 = vmatprep.subr.mxu0 0.0
    %1747 = vmatpush1.msra.mxu0 %v650
    %1748 = vmatprep.subr.mxu0 0.0
    %1749 = vmatpush1.msra.mxu0 %v653
    %1750 = vmatprep.subr.mxu0 0.0
    %1751 = vmatpush1.msra.mxu0 %v656
    %1752 = vmatprep.subr.mxu0 0.0
    %1753 = vmatpush1.msra.mxu0 %v659
    %1754 = vmatprep.subr.mxu0 0.0
    %1755 = vmatpush1.msra.mxu0 %v662
    %1756 = vmatprep.subr.mxu0 0.0
    %1757 = vmatpush1.msra.mxu0 %v665
    %1758 = vmatprep.subr.mxu0 0.0
    %1759 = vmatpush1.msra.mxu0 0.0
    %1760 = vmatprep.subr.mxu0 0.0
    %1761 = vmatpush1.msra.mxu0 0.0
    %1762 = vmatprep.subr.mxu0 0.0
    %1763 = vmatpush1.msra.mxu0 0.0
    %1764 = vmatprep.subr.mxu0 0.0
    %1765 = vmatpush1.msra.mxu0 0.0
    %1766 = vmatprep.subr.mxu0 0.0
    %1767 = vmatpush1.msra.mxu0 0.0
    %1768 = vmatprep.subr.mxu0 0.0
    %1769 = vmatpush1.msra.mxu0 0.0
    %1770 = vmatprep.subr.mxu0 0.0
    %1771 = vmatpush1.msra.mxu0 0.0
    %1772 = vmatprep.subr.mxu0 0.0
    %1773 = vmatpush1.msra.mxu0 0.0
    %1774 = vmatprep.subr.mxu0 0.0
    %1775 = vmatpush1.msra.mxu0 0.0
    %1776 = vmatprep.subr.mxu0 0.0
    %1777 = vmatpush1.msra.mxu0 0.0
    %1778 = vmatprep.subr.mxu0 0.0
    %1779 = vmatpush1.msra.mxu0 0.0
    %1780 = vmatprep.subr.mxu0 0.0
    %1781 = vmatpush1.msra.mxu0 0.0
    %1782 = vmatprep.subr.mxu0 0.0
    %1783 = vmatpush1.msra.mxu0 0.0
    %1784 = vmatprep.subr.mxu0 0.0
    %1785 = vmatpush1.msra.mxu0 0.0
    %1786 = vmatprep.subr.mxu0 0.0
    %1787 = vmatpush1.msra.mxu0 0.0
    %1788 = vmatprep.subr.mxu0 0.0
    %1789 = vmatpush1.msra.mxu0 0.0
    %1790 = vmatprep.subr.mxu0 0.0
    %1791 = vmatpush1.msra.mxu0 0.0
    %1792 = vmatprep.subr.mxu0 0.0
    %1793 = vmatpush1.msra.mxu0 0.0
    %1794 = vmatprep.subr.mxu0 0.0
    %1795 = vmatpush1.msra.mxu0 0.0
    %1796 = vmatprep.subr.mxu0 0.0
    %1797 = vmatpush1.msra.mxu0 0.0
    %1798 = vmatprep.subr.mxu0 0.0
    %1799 = vmatpush1.msra.mxu0 0.0
    %1800 = vmatprep.subr.mxu0 0.0
    %1801 = vmatpush1.msra.mxu0 0.0
    %1802 = vmatprep.subr.mxu0 0.0
    %1803 = vmatpush1.msra.mxu0 0.0
    %1804 = vmatprep.subr.mxu0 0.0
    %1805 = vmatpush1.msra.mxu0 0.0
    %1806 = vmatprep.mubr.f32.mxu0 0.0
    %1807 = vmatmul.mubr.f32.gmra.mrb[0].mxu0 %v1669
    %v1808 = vpop.f32.mrb[0].mxu0
    %v1809 = vadd.f32 0.0, %v1808
    %v1810 = vpop.f32.mrb[0].mxu0
    %1811 = vdwg.mxu0
    %v1812 = vadd.f32 %v505, %v1738
    %v1813 = vsub.f32 0.0, %v1812
    %v1814 = vmul.f32 %v1813, 1.442695
    %v1815 = vpow.pop %v1814
    %v1816 = vadd.f32 %v1815, 1.0
    %v1817 = vrcp.pop %v1816
    %v1818 = vadd.f32 %v507, %v1740
    %v1819 = vsub.f32 0.0, %v1818
    %v1820 = vmul.f32 %v1819, 1.442695
    %v1821 = vpow.pop %v1820
    %v1822 = vadd.f32 %v1821, 1.0
    %v1823 = vrcp.pop %v1822
    %v1824 = vadd.f32 %v1809, %v671
    %v1825 = vmul.f32 %v1817, %v1824
    %v1826 = vadd.f32 %v624, %v1825
    %v1827 = vtanh.pop %v1826
    %v1828 = vsub.f32 1.0, %v1823
    %v1829 = vmul.f32 %v1828, %v1827
    %v1830 = vmul.f32 %v1823, %v1665
    %v1831 = vadd.f32 %v1829, %v1830
    %s1832 = scalar_lea.vmem %s6, 48
    %1833 = vst.msk [vmem:[%s1832] sm:$0xff] %vm371, %v1831
    %v1835 = vsel %vm371, %v1831, 0
    %1837 = vmatprep.subr.mxu0 %v643
    %1838 = vmatpush1.msra.mxu0 %v642
    %1839 = vmatprep.subr.mxu0 %v646
    %1840 = vmatpush1.msra.mxu0 %v645
    %1841 = vmatprep.subr.mxu0 %v649
    %1842 = vmatpush1.msra.mxu0 %v648
    %1843 = vmatprep.subr.mxu0 %v652
    %1844 = vmatpush1.msra.mxu0 %v651
    %1845 = vmatprep.subr.mxu0 %v655
    %1846 = vmatpush1.msra.mxu0 %v654
    %1847 = vmatprep.subr.mxu0 %v658
    %1848 = vmatpush1.msra.mxu0 %v657
    %1849 = vmatprep.subr.mxu0 %v661
    %1850 = vmatpush1.msra.mxu0 %v660
    %1851 = vmatprep.subr.mxu0 %v664
    %1852 = vmatpush1.msra.mxu0 %v663
    %1853 = vmatprep.subr.mxu0 0.0
    %1854 = vmatpush1.msra.mxu0 0.0
    %1855 = vmatprep.subr.mxu0 0.0
    %1856 = vmatpush1.msra.mxu0 0.0
    %1857 = vmatprep.subr.mxu0 0.0
    %1858 = vmatpush1.msra.mxu0 0.0
    %1859 = vmatprep.subr.mxu0 0.0
    %1860 = vmatpush1.msra.mxu0 0.0
    %1861 = vmatprep.subr.mxu0 0.0
    %1862 = vmatpush1.msra.mxu0 0.0
    %1863 = vmatprep.subr.mxu0 0.0
    %1864 = vmatpush1.msra.mxu0 0.0
    %1865 = vmatprep.subr.mxu0 0.0
    %1866 = vmatpush1.msra.mxu0 0.0
    %1867 = vmatprep.subr.mxu0 0.0
    %1868 = vmatpush1.msra.mxu0 0.0
    %1869 = vmatprep.subr.mxu0 0.0
    %1870 = vmatpush1.msra.mxu0 0.0
    %1871 = vmatprep.subr.mxu0 0.0
    %1872 = vmatpush1.msra.mxu0 0.0
    %1873 = vmatprep.subr.mxu0 0.0
    %1874 = vmatpush1.msra.mxu0 0.0
    %1875 = vmatprep.subr.mxu0 0.0
    %1876 = vmatpush1.msra.mxu0 0.0
    %1877 = vmatprep.subr.mxu0 0.0
    %1878 = vmatpush1.msra.mxu0 0.0
    %1879 = vmatprep.subr.mxu0 0.0
    %1880 = vmatpush1.msra.mxu0 0.0
    %1881 = vmatprep.subr.mxu0 0.0
    %1882 = vmatpush1.msra.mxu0 0.0
    %1883 = vmatprep.subr.mxu0 0.0
    %1884 = vmatpush1.msra.mxu0 0.0
    %1885 = vmatprep.subr.mxu0 0.0
    %1886 = vmatpush1.msra.mxu0 0.0
    %1887 = vmatprep.subr.mxu0 0.0
    %1888 = vmatpush1.msra.mxu0 0.0
    %1889 = vmatprep.subr.mxu0 0.0
    %1890 = vmatpush1.msra.mxu0 0.0
    %1891 = vmatprep.subr.mxu0 0.0
    %1892 = vmatpush1.msra.mxu0 0.0
    %1893 = vmatprep.subr.mxu0 0.0
    %1894 = vmatpush1.msra.mxu0 0.0
    %1895 = vmatprep.subr.mxu0 0.0
    %1896 = vmatpush1.msra.mxu0 0.0
    %1897 = vmatprep.subr.mxu0 0.0
    %1898 = vmatpush1.msra.mxu0 0.0
    %1899 = vmatprep.subr.mxu0 0.0
    %1900 = vmatpush1.msra.mxu0 0.0
    %1901 = vmatprep.mubr.f32.mxu0 0.0
    %1902 = vmatmul.mubr.f32.gmra.mrb[0].mxu0 %v1835
    %v1903 = vpop.f32.mrb[0].mxu0
    %v1904 = vadd.f32 0.0, %v1903
    %v1905 = vpop.f32.mrb[0].mxu0
    %v1906 = vadd.f32 0.0, %v1905
    %1907 = vdwg.mxu0
    %1908 = vmatprep.subr.mxu0 0.0
    %1909 = vmatpush1.msra.mxu0 %v644
    %1910 = vmatprep.subr.mxu0 0.0
    %1911 = vmatpush1.msra.mxu0 %v647
    %1912 = vmatprep.subr.mxu0 0.0
    %1913 = vmatpush1.msra.mxu0 %v650
    %1914 = vmatprep.subr.mxu0 0.0
    %1915 = vmatpush1.msra.mxu0 %v653
    %1916 = vmatprep.subr.mxu0 0.0
    %1917 = vmatpush1.msra.mxu0 %v656
    %1918 = vmatprep.subr.mxu0 0.0
    %1919 = vmatpush1.msra.mxu0 %v659
    %1920 = vmatprep.subr.mxu0 0.0
    %1921 = vmatpush1.msra.mxu0 %v662
    %1922 = vmatprep.subr.mxu0 0.0
    %1923 = vmatpush1.msra.mxu0 %v665
    %1924 = vmatprep.subr.mxu0 0.0
    %1925 = vmatpush1.msra.mxu0 0.0
    %1926 = vmatprep.subr.mxu0 0.0
    %1927 = vmatpush1.msra.mxu0 0.0
    %1928 = vmatprep.subr.mxu0 0.0
    %1929 = vmatpush1.msra.mxu0 0.0
    %1930 = vmatprep.subr.mxu0 0.0
    %1931 = vmatpush1.msra.mxu0 0.0
    %1932 = vmatprep.subr.mxu0 0.0
    %1933 = vmatpush1.msra.mxu0 0.0
    %1934 = vmatprep.subr.mxu0 0.0
    %1935 = vmatpush1.msra.mxu0 0.0
    %1936 = vmatprep.subr.mxu0 0.0
    %1937 = vmatpush1.msra.mxu0 0.0
    %1938 = vmatprep.subr.mxu0 0.0
    %1939 = vmatpush1.msra.mxu0 0.0
    %1940 = vmatprep.subr.mxu0 0.0
    %1941 = vmatpush1.msra.mxu0 0.0
    %1942 = vmatprep.subr.mxu0 0.0
    %1943 = vmatpush1.msra.mxu0 0.0
    %1944 = vmatprep.subr.mxu0 0.0
    %1945 = vmatpush1.msra.mxu0 0.0
    %1946 = vmatprep.subr.mxu0 0.0
    %1947 = vmatpush1.msra.mxu0 0.0
    %1948 = vmatprep.subr.mxu0 0.0
    %1949 = vmatpush1.msra.mxu0 0.0
    %1950 = vmatprep.subr.mxu0 0.0
    %1951 = vmatpush1.msra.mxu0 0.0
    %1952 = vmatprep.subr.mxu0 0.0
    %1953 = vmatpush1.msra.mxu0 0.0
    %1954 = vmatprep.subr.mxu0 0.0
    %1955 = vmatpush1.msra.mxu0 0.0
    %1956 = vmatprep.subr.mxu0 0.0
    %1957 = vmatpush1.msra.mxu0 0.0
    %1958 = vmatprep.subr.mxu0 0.0
    %1959 = vmatpush1.msra.mxu0 0.0
    %1960 = vmatprep.subr.mxu0 0.0
    %1961 = vmatpush1.msra.mxu0 0.0
    %1962 = vmatprep.subr.mxu0 0.0
    %1963 = vmatpush1.msra.mxu0 0.0
    %1964 = vmatprep.subr.mxu0 0.0
    %1965 = vmatpush1.msra.mxu0 0.0
    %1966 = vmatprep.subr.mxu0 0.0
    %1967 = vmatpush1.msra.mxu0 0.0
    %1968 = vmatprep.subr.mxu0 0.0
    %1969 = vmatpush1.msra.mxu0 0.0
    %1970 = vmatprep.subr.mxu0 0.0
    %1971 = vmatpush1.msra.mxu0 0.0
    %1972 = vmatprep.mubr.f32.mxu0 0.0
    %1973 = vmatmul.mubr.f32.gmra.mrb[0].mxu0 %v1835
    %v1974 = vpop.f32.mrb[0].mxu0
    %v1975 = vadd.f32 0.0, %v1974
    %v1976 = vpop.f32.mrb[0].mxu0
    %1977 = vdwg.mxu0
    %v1978 = vadd.f32 %v511, %v1904
    %v1979 = vsub.f32 0.0, %v1978
    %v1980 = vmul.f32 %v1979, 1.442695
    %v1981 = vpow.pop %v1980
    %v1982 = vadd.f32 %v1981, 1.0
    %v1983 = vrcp.pop %v1982
    %v1984 = vadd.f32 %v513, %v1906
    %v1985 = vsub.f32 0.0, %v1984
    %v1986 = vmul.f32 %v1985, 1.442695
    %v1987 = vpow.pop %v1986
    %v1988 = vadd.f32 %v1987, 1.0
    %v1989 = vrcp.pop %v1988
    %v1990 = vadd.f32 %v1975, %v671
    %v1991 = vmul.f32 %v1983, %v1990
    %v1992 = vadd.f32 %v629, %v1991
    %v1993 = vtanh.pop %v1992
    %v1994 = vsub.f32 1.0, %v1989
    %v1995 = vmul.f32 %v1994, %v1993
    %v1996 = vmul.f32 %v1989, %v1831
    %v1997 = vadd.f32 %v1995, %v1996
    %s1998 = scalar_lea.vmem %s6, 56
    %1999 = vst.msk [vmem:[%s1998] sm:$0xff] %vm371, %v1997
    %v2001 = vsel %vm371, %v1997, 0
    %2003 = vmatprep.subr.mxu0 %v643
    %2004 = vmatpush1.msra.mxu0 %v642
    %2005 = vmatprep.subr.mxu0 %v646
    %2006 = vmatpush1.msra.mxu0 %v645
    %2007 = vmatprep.subr.mxu0 %v649
    %2008 = vmatpush1.msra.mxu0 %v648
    %2009 = vmatprep.subr.mxu0 %v652
    %2010 = vmatpush1.msra.mxu0 %v651
    %2011 = vmatprep.subr.mxu0 %v655
    %2012 = vmatpush1.msra.mxu0 %v654
    %2013 = vmatprep.subr.mxu0 %v658
    %2014 = vmatpush1.msra.mxu0 %v657
    %2015 = vmatprep.subr.mxu0 %v661
    %2016 = vmatpush1.msra.mxu0 %v660
    %2017 = vmatprep.subr.mxu0 %v664
    %2018 = vmatpush1.msra.mxu0 %v663
    %2019 = vmatprep.subr.mxu0 0.0
    %2020 = vmatpush1.msra.mxu0 0.0
    %2021 = vmatprep.subr.mxu0 0.0
    %2022 = vmatpush1.msra.mxu0 0.0
    %2023 = vmatprep.subr.mxu0 0.0
    %2024 = vmatpush1.msra.mxu0 0.0
    %2025 = vmatprep.subr.mxu0 0.0
    %2026 = vmatpush1.msra.mxu0 0.0
    %2027 = vmatprep.subr.mxu0 0.0
    %2028 = vmatpush1.msra.mxu0 0.0
    %2029 = vmatprep.subr.mxu0 0.0
    %2030 = vmatpush1.msra.mxu0 0.0
    %2031 = vmatprep.subr.mxu0 0.0
    %2032 = vmatpush1.msra.mxu0 0.0
    %2033 = vmatprep.subr.mxu0 0.0
    %2034 = vmatpush1.msra.mxu0 0.0
    %2035 = vmatprep.subr.mxu0 0.0
    %2036 = vmatpush1.msra.mxu0 0.0
    %2037 = vmatprep.subr.mxu0 0.0
    %2038 = vmatpush1.msra.mxu0 0.0
    %2039 = vmatprep.subr.mxu0 0.0
    %2040 = vmatpush1.msra.mxu0 0.0
    %2041 = vmatprep.subr.mxu0 0.0
    %2042 = vmatpush1.msra.mxu0 0.0
    %2043 = vmatprep.subr.mxu0 0.0
    %2044 = vmatpush1.msra.mxu0 0.0
    %2045 = vmatprep.subr.mxu0 0.0
    %2046 = vmatpush1.msra.mxu0 0.0
    %2047 = vmatprep.subr.mxu0 0.0
    %2048 = vmatpush1.msra.mxu0 0.0
    %2049 = vmatprep.subr.mxu0 0.0
    %2050 = vmatpush1.msra.mxu0 0.0
    %2051 = vmatprep.subr.mxu0 0.0
    %2052 = vmatpush1.msra.mxu0 0.0
    %2053 = vmatprep.subr.mxu0 0.0
    %2054 = vmatpush1.msra.mxu0 0.0
    %2055 = vmatprep.subr.mxu0 0.0
    %2056 = vmatpush1.msra.mxu0 0.0
    %2057 = vmatprep.subr.mxu0 0.0
    %2058 = vmatpush1.msra.mxu0 0.0
    %2059 = vmatprep.subr.mxu0 0.0
    %2060 = vmatpush1.msra.mxu0 0.0
    %2061 = vmatprep.subr.mxu0 0.0
    %2062 = vmatpush1.msra.mxu0 0.0
    %2063 = vmatprep.subr.mxu0 0.0
    %2064 = vmatpush1.msra.mxu0 0.0
    %2065 = vmatprep.subr.mxu0 0.0
    %2066 = vmatpush1.msra.mxu0 0.0
    %2067 = vmatprep.mubr.f32.mxu0 0.0
    %2068 = vmatmul.mubr.f32.gmra.mrb[0].mxu0 %v2001
    %v2069 = vpop.f32.mrb[0].mxu0
    %v2070 = vadd.f32 0.0, %v2069
    %v2071 = vpop.f32.mrb[0].mxu0
    %v2072 = vadd.f32 0.0, %v2071
    %2073 = vdwg.mxu0
    %2074 = vmatprep.subr.mxu0 0.0
    %2075 = vmatpush1.msra.mxu0 %v644
    %2076 = vmatprep.subr.mxu0 0.0
    %2077 = vmatpush1.msra.mxu0 %v647
    %2078 = vmatprep.subr.mxu0 0.0
    %2079 = vmatpush1.msra.mxu0 %v650
    %2080 = vmatprep.subr.mxu0 0.0
    %2081 = vmatpush1.msra.mxu0 %v653
    %2082 = vmatprep.subr.mxu0 0.0
    %2083 = vmatpush1.msra.mxu0 %v656
    %2084 = vmatprep.subr.mxu0 0.0
    %2085 = vmatpush1.msra.mxu0 %v659
    %2086 = vmatprep.subr.mxu0 0.0
    %2087 = vmatpush1.msra.mxu0 %v662
    %2088 = vmatprep.subr.mxu0 0.0
    %2089 = vmatpush1.msra.mxu0 %v665
    %2090 = vmatprep.subr.mxu0 0.0
    %2091 = vmatpush1.msra.mxu0 0.0
    %2092 = vmatprep.subr.mxu0 0.0
    %2093 = vmatpush1.msra.mxu0 0.0
    %2094 = vmatprep.subr.mxu0 0.0
    %2095 = vmatpush1.msra.mxu0 0.0
    %2096 = vmatprep.subr.mxu0 0.0
    %2097 = vmatpush1.msra.mxu0 0.0
    %2098 = vmatprep.subr.mxu0 0.0
    %2099 = vmatpush1.msra.mxu0 0.0
    %2100 = vmatprep.subr.mxu0 0.0
    %2101 = vmatpush1.msra.mxu0 0.0
    %2102 = vmatprep.subr.mxu0 0.0
    %2103 = vmatpush1.msra.mxu0 0.0
    %2104 = vmatprep.subr.mxu0 0.0
    %2105 = vmatpush1.msra.mxu0 0.0
    %2106 = vmatprep.subr.mxu0 0.0
    %2107 = vmatpush1.msra.mxu0 0.0
    %2108 = vmatprep.subr.mxu0 0.0
    %2109 = vmatpush1.msra.mxu0 0.0
    %2110 = vmatprep.subr.mxu0 0.0
    %2111 = vmatpush1.msra.mxu0 0.0
    %2112 = vmatprep.subr.mxu0 0.0
    %2113 = vmatpush1.msra.mxu0 0.0
    %2114 = vmatprep.subr.mxu0 0.0
    %2115 = vmatpush1.msra.mxu0 0.0
    %2116 = vmatprep.subr.mxu0 0.0
    %2117 = vmatpush1.msra.mxu0 0.0
    %2118 = vmatprep.subr.mxu0 0.0
    %2119 = vmatpush1.msra.mxu0 0.0
    %2120 = vmatprep.subr.mxu0 0.0
    %2121 = vmatpush1.msra.mxu0 0.0
    %2122 = vmatprep.subr.mxu0 0.0
    %2123 = vmatpush1.msra.mxu0 0.0
    %2124 = vmatprep.subr.mxu0 0.0
    %2125 = vmatpush1.msra.mxu0 0.0
    %2126 = vmatprep.subr.mxu0 0.0
    %2127 = vmatpush1.msra.mxu0 0.0
    %2128 = vmatprep.subr.mxu0 0.0
    %2129 = vmatpush1.msra.mxu0 0.0
    %2130 = vmatprep.subr.mxu0 0.0
    %2131 = vmatpush1.msra.mxu0 0.0
    %2132 = vmatprep.subr.mxu0 0.0
    %2133 = vmatpush1.msra.mxu0 0.0
    %2134 = vmatprep.subr.mxu0 0.0
    %2135 = vmatpush1.msra.mxu0 0.0
    %2136 = vmatprep.subr.mxu0 0.0
    %2137 = vmatpush1.msra.mxu0 0.0
    %2138 = vmatprep.mubr.f32.mxu0 0.0
    %2139 = vmatmul.mubr.f32.gmra.mrb[0].mxu0 %v2001
    %v2140 = vpop.f32.mrb[0].mxu0
    %v2141 = vadd.f32 0.0, %v2140
    %v2142 = vpop.f32.mrb[0].mxu0
    %2143 = vdwg.mxu0
    %v2144 = vadd.f32 %v517, %v2070
    %v2145 = vsub.f32 0.0, %v2144
    %v2146 = vmul.f32 %v2145, 1.442695
    %v2147 = vpow.pop %v2146
    %v2148 = vadd.f32 %v2147, 1.0
    %v2149 = vrcp.pop %v2148
    %v2150 = vadd.f32 %v519, %v2072
    %v2151 = vsub.f32 0.0, %v2150
    %v2152 = vmul.f32 %v2151, 1.442695
    %v2153 = vpow.pop %v2152
    %v2154 = vadd.f32 %v2153, 1.0
    %v2155 = vrcp.pop %v2154
    %v2156 = vadd.f32 %v2141, %v671
    %v2157 = vmul.f32 %v2149, %v2156
    %v2158 = vadd.f32 %v634, %v2157
    %v2159 = vtanh.pop %v2158
    %v2160 = vsub.f32 1.0, %v2155
    %v2161 = vmul.f32 %v2160, %v2159
    %v2162 = vmul.f32 %v2155, %v1997
    %v2163 = vadd.f32 %v2161, %v2162
    %s2164 = scalar_lea.vmem %s6, 64
    %2165 = vst.msk [vmem:[%s2164] sm:$0xff] %vm371, %v2163
    %v2167 = vsel %vm371, %v2163, 0
    %2169 = vmatprep.subr.mxu0 %v643
    %2170 = vmatpush1.msra.mxu0 %v642
    %2171 = vmatprep.subr.mxu0 %v646
    %2172 = vmatpush1.msra.mxu0 %v645
    %2173 = vmatprep.subr.mxu0 %v649
    %2174 = vmatpush1.msra.mxu0 %v648
    %2175 = vmatprep.subr.mxu0 %v652
    %2176 = vmatpush1.msra.mxu0 %v651
    %2177 = vmatprep.subr.mxu0 %v655
    %2178 = vmatpush1.msra.mxu0 %v654
    %2179 = vmatprep.subr.mxu0 %v658
    %2180 = vmatpush1.msra.mxu0 %v657
    %2181 = vmatprep.subr.mxu0 %v661
    %2182 = vmatpush1.msra.mxu0 %v660
    %2183 = vmatprep.subr.mxu0 %v664
    %2184 = vmatpush1.msra.mxu0 %v663
    %2185 = vmatprep.subr.mxu0 0.0
    %2186 = vmatpush1.msra.mxu0 0.0
    %2187 = vmatprep.subr.mxu0 0.0
    %2188 = vmatpush1.msra.mxu0 0.0
    %2189 = vmatprep.subr.mxu0 0.0
    %2190 = vmatpush1.msra.mxu0 0.0
    %2191 = vmatprep.subr.mxu0 0.0
    %2192 = vmatpush1.msra.mxu0 0.0
    %2193 = vmatprep.subr.mxu0 0.0
    %2194 = vmatpush1.msra.mxu0 0.0
    %2195 = vmatprep.subr.mxu0 0.0
    %2196 = vmatpush1.msra.mxu0 0.0
    %2197 = vmatprep.subr.mxu0 0.0
    %2198 = vmatpush1.msra.mxu0 0.0
    %2199 = vmatprep.subr.mxu0 0.0
    %2200 = vmatpush1.msra.mxu0 0.0
    %2201 = vmatprep.subr.mxu0 0.0
    %2202 = vmatpush1.msra.mxu0 0.0
    %2203 = vmatprep.subr.mxu0 0.0
    %2204 = vmatpush1.msra.mxu0 0.0
    %2205 = vmatprep.subr.mxu0 0.0
    %2206 = vmatpush1.msra.mxu0 0.0
    %2207 = vmatprep.subr.mxu0 0.0
    %2208 = vmatpush1.msra.mxu0 0.0
    %2209 = vmatprep.subr.mxu0 0.0
    %2210 = vmatpush1.msra.mxu0 0.0
    %2211 = vmatprep.subr.mxu0 0.0
    %2212 = vmatpush1.msra.mxu0 0.0
    %2213 = vmatprep.subr.mxu0 0.0
    %2214 = vmatpush1.msra.mxu0 0.0
    %2215 = vmatprep.subr.mxu0 0.0
    %2216 = vmatpush1.msra.mxu0 0.0
    %2217 = vmatprep.subr.mxu0 0.0
    %2218 = vmatpush1.msra.mxu0 0.0
    %2219 = vmatprep.subr.mxu0 0.0
    %2220 = vmatpush1.msra.mxu0 0.0
    %2221 = vmatprep.subr.mxu0 0.0
    %2222 = vmatpush1.msra.mxu0 0.0
    %2223 = vmatprep.subr.mxu0 0.0
    %2224 = vmatpush1.msra.mxu0 0.0
    %2225 = vmatprep.subr.mxu0 0.0
    %2226 = vmatpush1.msra.mxu0 0.0
    %2227 = vmatprep.subr.mxu0 0.0
    %2228 = vmatpush1.msra.mxu0 0.0
    %2229 = vmatprep.subr.mxu0 0.0
    %2230 = vmatpush1.msra.mxu0 0.0
    %2231 = vmatprep.subr.mxu0 0.0
    %2232 = vmatpush1.msra.mxu0 0.0
    %2233 = vmatprep.mubr.f32.mxu0 0.0
    %2234 = vmatmul.mubr.f32.gmra.mrb[0].mxu0 %v2167
    %v2235 = vpop.f32.mrb[0].mxu0
    %v2236 = vadd.f32 0.0, %v2235
    %v2237 = vpop.f32.mrb[0].mxu0
    %v2238 = vadd.f32 0.0, %v2237
    %2239 = vdwg.mxu0
    %2240 = vmatprep.subr.mxu0 0.0
    %2241 = vmatpush1.msra.mxu0 %v644
    %2242 = vmatprep.subr.mxu0 0.0
    %2243 = vmatpush1.msra.mxu0 %v647
    %2244 = vmatprep.subr.mxu0 0.0
    %2245 = vmatpush1.msra.mxu0 %v650
    %2246 = vmatprep.subr.mxu0 0.0
    %2247 = vmatpush1.msra.mxu0 %v653
    %2248 = vmatprep.subr.mxu0 0.0
    %2249 = vmatpush1.msra.mxu0 %v656
    %2250 = vmatprep.subr.mxu0 0.0
    %2251 = vmatpush1.msra.mxu0 %v659
    %2252 = vmatprep.subr.mxu0 0.0
    %2253 = vmatpush1.msra.mxu0 %v662
    %2254 = vmatprep.subr.mxu0 0.0
    %2255 = vmatpush1.msra.mxu0 %v665
    %2256 = vmatprep.subr.mxu0 0.0
    %2257 = vmatpush1.msra.mxu0 0.0
    %2258 = vmatprep.subr.mxu0 0.0
    %2259 = vmatpush1.msra.mxu0 0.0
    %2260 = vmatprep.subr.mxu0 0.0
    %2261 = vmatpush1.msra.mxu0 0.0
    %2262 = vmatprep.subr.mxu0 0.0
    %2263 = vmatpush1.msra.mxu0 0.0
    %2264 = vmatprep.subr.mxu0 0.0
    %2265 = vmatpush1.msra.mxu0 0.0
    %2266 = vmatprep.subr.mxu0 0.0
    %2267 = vmatpush1.msra.mxu0 0.0
    %2268 = vmatprep.subr.mxu0 0.0
    %2269 = vmatpush1.msra.mxu0 0.0
    %2270 = vmatprep.subr.mxu0 0.0
    %2271 = vmatpush1.msra.mxu0 0.0
    %2272 = vmatprep.subr.mxu0 0.0
    %2273 = vmatpush1.msra.mxu0 0.0
    %2274 = vmatprep.subr.mxu0 0.0
    %2275 = vmatpush1.msra.mxu0 0.0
    %2276 = vmatprep.subr.mxu0 0.0
    %2277 = vmatpush1.msra.mxu0 0.0
    %2278 = vmatprep.subr.mxu0 0.0
    %2279 = vmatpush1.msra.mxu0 0.0
    %2280 = vmatprep.subr.mxu0 0.0
    %2281 = vmatpush1.msra.mxu0 0.0
    %2282 = vmatprep.subr.mxu0 0.0
    %2283 = vmatpush1.msra.mxu0 0.0
    %2284 = vmatprep.subr.mxu0 0.0
    %2285 = vmatpush1.msra.mxu0 0.0
    %2286 = vmatprep.subr.mxu0 0.0
    %2287 = vmatpush1.msra.mxu0 0.0
    %2288 = vmatprep.subr.mxu0 0.0
    %2289 = vmatpush1.msra.mxu0 0.0
    %2290 = vmatprep.subr.mxu0 0.0
    %2291 = vmatpush1.msra.mxu0 0.0
    %2292 = vmatprep.subr.mxu0 0.0
    %2293 = vmatpush1.msra.mxu0 0.0
    %2294 = vmatprep.subr.mxu0 0.0
    %2295 = vmatpush1.msra.mxu0 0.0
    %2296 = vmatprep.subr.mxu0 0.0
    %2297 = vmatpush1.msra.mxu0 0.0
    %2298 = vmatprep.subr.mxu0 0.0
    %2299 = vmatpush1.msra.mxu0 0.0
    %2300 = vmatprep.subr.mxu0 0.0
    %2301 = vmatpush1.msra.mxu0 0.0
    %2302 = vmatprep.subr.mxu0 0.0
    %2303 = vmatpush1.msra.mxu0 0.0
    %2304 = vmatprep.mubr.f32.mxu0 0.0
    %2305 = vmatmul.mubr.f32.gmra.mrb[0].mxu0 %v2167
    %v2306 = vpop.f32.mrb[0].mxu0
    %v2307 = vadd.f32 0.0, %v2306
    %v2308 = vpop.f32.mrb[0].mxu0
    %2309 = vdwg.mxu0
    %v2310 = vadd.f32 %v523, %v2236
    %v2311 = vsub.f32 0.0, %v2310
    %v2312 = vmul.f32 %v2311, 1.442695
    %v2313 = vpow.pop %v2312
    %v2314 = vadd.f32 %v2313, 1.0
    %v2315 = vrcp.pop %v2314
    %v2316 = vadd.f32 %v525, %v2238
    %v2317 = vsub.f32 0.0, %v2316
    %v2318 = vmul.f32 %v2317, 1.442695
    %v2319 = vpow.pop %v2318
    %v2320 = vadd.f32 %v2319, 1.0
    %v2321 = vrcp.pop %v2320
    %v2322 = vadd.f32 %v2307, %v671
    %v2323 = vmul.f32 %v2315, %v2322
    %v2324 = vadd.f32 %v639, %v2323
    %v2325 = vtanh.pop %v2324
    %v2326 = vsub.f32 1.0, %v2321
    %v2327 = vmul.f32 %v2326, %v2325
    %v2328 = vmul.f32 %v2321, %v2163
    %v2329 = vadd.f32 %v2327, %v2328
    %s2330 = scalar_lea.vmem %s6, 72
    %2331 = vst.msk [vmem:[%s2330] sm:$0xff] %vm371, %v2329
    %vm2332 = vcmask 261120
    %2333 = vst.msk [vmem:[#allocation7] sm:$0xff] %vm2332, %v2329
    %2335 = vrot.lane.b32.xlu0 %v2329, 96
    %v2336 = vpop.permute.xlu0 %2335
    %s2338 = scalar_lea.vmem [#allocation7], 8
    %2339 = vst.msk [vmem:[%s2338] sm:$0xff] %vm2332, %v2336
    // Predicated region
    $region34: #{text_encoder_forward.1} parent=1 // pred_check
      _
    $region35: #{text_encoder_forward.1} parent=1 // pred_check_branch
      %2341 = sbr.rel (0) target = $region37
    $region36: #{text_encoder_forward.1} parent=1 // pred_region
      _
    $region37: #{text_encoder_forward.1} parent=1 // pred_fallthru
      _
    // Predicated region
    $region38: #{text_encoder_forward.1} parent=1 // pred_check
      _
    $region39: #{text_encoder_forward.1} parent=1 // pred_check_branch
      %2343 = sbr.rel (0) target = $region41
    $region40: #{text_encoder_forward.1} parent=1 // pred_region
      %s2345 = ssub.s32 256, 256
      %2346 = vsyncadd [#allocation4], %s2345
      %s2347 = sshll.u32 [#allocation7], 4
      %s2348 = int_to_ptr.vmem [resolvable:$true] %s2347
      %2353 = dma.vmem_to_hbm [thread:$0]  %s2348, 256, %s7, [#allocation4], 128, 128, 8
    $region41: #{text_encoder_forward.1} parent=1 // pred_fallthru
      _
    // Predicated region
    $region42: #{text_encoder_forward.1} parent=1 // pred_check
      _
    $region43: #{text_encoder_forward.1} parent=1 // pred_check_branch
      %2355 = sbr.rel (0) target = $region45
    $region44: #{text_encoder_forward.1} parent=1 // pred_region
      _
    $region45: #{text_encoder_forward.1} parent=1 // pred_fallthru
      _
    // Predicated region
    $region46: #{text_encoder_forward.1} parent=1 // pred_check
      _
    $region47: #{text_encoder_forward.1} parent=1 // pred_check_branch
      %2357 = sbr.rel (0) target = $region49
    $region48: #{text_encoder_forward.1} parent=1 // pred_region
      %2358 = dma.done [#allocation4], 256
    $region49: #{text_encoder_forward.1} parent=1 // pred_fallthru
      _
    %2359 = vsyncpa [#allocation3], 1
    %2360 = vsyncpa [#allocation6], 1
    %2361 = vsyncpa [#allocation4], 1

</llo_original>
